<compile_context>
chip_gen: v7x
topology: tpu7x:2x2x1
jax: 0.10.0
libtpu: 0.0.40
codegen_flags: <defaults>
</compile_context>

<pallas_src>
import functools
import math

import jax
import jax.numpy as jnp
from jax import lax
from jax.experimental import pallas as pl
from jax.experimental.pallas import tpu as pltpu

_LN_EPS = 1e-5


def _round_up(x, m):
    return (x + m - 1) // m * m


def _vmem_limit_bytes(needed):
    try:
        cap = int(pltpu.get_tpu_info().vmem_capacity_bytes)
    except Exception:
        cap = 64 * 1024 * 1024  # conservative: v7x physical VMEM per TensorCore
    return int(min(max(needed, 32 * 1024 * 1024), (cap * 7) // 8))


def _layernorm_f32(x, g, b):
    mu = jnp.mean(x, axis=-1, keepdims=True)
    xc = x - mu
    var = jnp.mean(xc * xc, axis=-1, keepdims=True)
    return xc * lax.rsqrt(var + _LN_EPS) * g + b


# ---------------- Kernel 1: ln_1 + fused QKV projection ----------------
def _ln_qkv_kernel(x_ref, g_ref, b_ref, w_ref, bias_ref, o_ref):
    x = x_ref[...].astype(jnp.float32)
    xn = _layernorm_f32(x, g_ref[...].astype(jnp.float32), b_ref[...].astype(jnp.float32))
    # Feed the MXU in the weights' native dtype; accumulate in f32.
    qkv = jnp.dot(xn.astype(w_ref.dtype), w_ref[...], preferred_element_type=jnp.float32)
    o_ref[...] = (qkv + bias_ref[...].astype(jnp.float32)).astype(o_ref.dtype)


# ---------------- Kernel 2: causal attention, one (batch, head) per grid step ----------------
def _causal_attn_kernel(q_ref, k_ref, v_ref, o_ref, *, scale):
    # TODO(synk): for long sequences use a flash-style streaming softmax over KV tiles;
    # this kernel keeps the full (T, T) score matrix for one head in VMEM.
    q = q_ref[...].astype(jnp.float32)  # (T, hd)
    k = k_ref[...].astype(jnp.float32)
    v = v_ref[...].astype(jnp.float32)
    s = jnp.dot(q, k.T, preferred_element_type=jnp.float32) * scale
    t = s.shape[0]
    row = lax.broadcasted_iota(jnp.int32, (t, t), 0)
    col = lax.broadcasted_iota(jnp.int32, (t, t), 1)
    s = jnp.where(col <= row, s, -1e30)
    s = s - jnp.max(s, axis=-1, keepdims=True)
    p = jnp.exp(s)
    p = p / jnp.sum(p, axis=-1, keepdims=True)
    o_ref[...] = jnp.dot(p, v, preferred_element_type=jnp.float32).astype(o_ref.dtype)


# ------- Kernel 3: attn c_proj + residual, then ln_2 + MLP(GELU tanh) + residual -------
def _proj_res_ln_mlp_kernel(attn_ref, x_ref, wp_ref, bp_ref,
                            g2_ref, b2_ref, wfc_ref, bfc_ref,
                            wpr_ref, bpr_ref, o_ref):
    # Attention output projection + first residual (f32 accumulation on the MXU).
    proj = jnp.dot(attn_ref[...], wp_ref[...], preferred_element_type=jnp.float32)
    x1 = x_ref[...].astype(jnp.float32) + proj + bp_ref[...].astype(jnp.float32)

    # ln_2 in f32.
    xn = _layernorm_f32(x1, g2_ref[...].astype(jnp.float32), b2_ref[...].astype(jnp.float32))

    # MLP: c_fc -> GELU(tanh) -> c_proj.  Operands stay in the weights' dtype for the MXU;
    # GELU polynomial/tanh stays in f32 (tanh lands on the EUP slot, hidden under MXU cycles).
    # TODO(synk): for very large C on v7x (64 MiB VMEM), stream the 4C hidden dim as a
    # reduction grid axis instead of keeping both MLP weights resident.
    h = jnp.dot(xn.astype(wfc_ref.dtype), wfc_ref[...], preferred_element_type=jnp.float32)
    h = h + bfc_ref[...].astype(jnp.float32)
    c = math.sqrt(2.0 / math.pi)
    h = 0.5 * h * (1.0 + jnp.tanh(c * (h + 0.044715 * h * h * h)))
    out = jnp.dot(h.astype(wpr_ref.dtype), wpr_ref[...], preferred_element_type=jnp.float32)
    out = out + bpr_ref[...].astype(jnp.float32) + x1  # second residual
    o_ref[...] = out.astype(o_ref.dtype)


def block_forward_pallas(x, ln1_g, ln1_b, w_attn, b_attn, w_attn_proj, b_attn_proj,
                         ln2_g, ln2_b, w_fc, b_fc, w_proj, b_proj,
                         *, n_heads, block_rows=256):
    """x: (B, T, C). Weights in (in, out) layout. Returns (B, T, C)."""
    B, T, C = x.shape
    assert C % n_heads == 0
    hd = C // n_heads
    H4 = w_fc.shape[1]
    M = B * T

    # Row tile: big enough to feed the MXU, sublane-aligned; pad tail rows for arbitrary B*T.
    tm = min(block_rows, _round_up(M, 8))
    Mp = _round_up(M, tm)
    grid_rows = Mp // tm

    itemsize = jnp.dtype(x.dtype).itemsize
    weight_bytes = (C * 3 * C + 3 * C + C * C + C + C * H4 + H4 + H4 * C + C + 4 * C) * itemsize
    tile_bytes = 2 * (4 * tm * C + tm * 3 * C) * itemsize          # double-buffered row tiles
    scratch_bytes = (tm * H4 + 6 * tm * C) * 4                     # f32 intermediates
    vmem_limit = _vmem_limit_bytes(2 * weight_bytes + tile_bytes + scratch_bytes + (4 << 20))

    x2 = x.reshape(M, C)
    x2p = jnp.pad(x2, ((0, Mp - M), (0, 0))) if Mp != M else x2

    row_spec_c = pl.BlockSpec((tm, C), lambda i: (i, 0))

    def full(shape):
        return pl.BlockSpec(shape, lambda i, _s=shape: (0,) * len(_s))

    # ---- 1) ln_1 + QKV projection ----
    qkv = pl.pallas_call(
        _ln_qkv_kernel,
        out_shape=jax.ShapeDtypeStruct((Mp, 3 * C), x.dtype),
        grid_spec=pltpu.PrefetchScalarGridSpec(
            num_scalar_prefetch=0,
            grid=(grid_rows,),
            in_specs=[
                row_spec_c,
                full((1, C)), full((1, C)),
                full((C, 3 * C)), full((1, 3 * C)),
            ],
            out_specs=pl.BlockSpec((tm, 3 * C), lambda i: (i, 0)),
        ),
        compiler_params=pltpu.CompilerParams(
            dimension_semantics=("parallel",), vmem_limit_bytes=vmem_limit),
        cost_estimate=pl.CostEstimate(
            flops=2 * Mp * C * 3 * C, transcendentals=Mp,
            bytes_accessed=(Mp * 4 * C + 3 * C * C + 5 * C) * itemsize),
    )(x2p, ln1_g.reshape(1, C), ln1_b.reshape(1, C), w_attn, b_attn.reshape(1, 3 * C))

    q, k, v = jnp.split(qkv[:M].reshape(B, T, 3 * C), 3, axis=-1)
    q = q.reshape(B, T, n_heads, hd).transpose(0, 2, 1, 3)
    k = k.reshape(B, T, n_heads, hd).transpose(0, 2, 1, 3)
    v = v.reshape(B, T, n_heads, hd).transpose(0, 2, 1, 3)

    # ---- 2) causal self-attention, grid over (batch, head) ----
    head_spec = pl.BlockSpec((None, None, T, hd), lambda b, h: (b, h, 0, 0))
    attn = pl.pallas_call(
        functools.partial(_causal_attn_kernel, scale=1.0 / math.sqrt(hd)),
        out_shape=jax.ShapeDtypeStruct((B, n_heads, T, hd), x.dtype),
        grid_spec=pltpu.PrefetchScalarGridSpec(
            num_scalar_prefetch=0,
            grid=(B, n_heads),
            in_specs=[head_spec, head_spec, head_spec],
            out_specs=head_spec,
        ),
        compiler_params=pltpu.CompilerParams(
            dimension_semantics=("parallel", "parallel"), vmem_limit_bytes=vmem_limit),
        cost_estimate=pl.CostEstimate(
            flops=4 * B * n_heads * T * T * hd,
            transcendentals=B * n_heads * T * T,
            bytes_accessed=4 * B * n_heads * T * hd * itemsize),
    )(q, k, v)

    attn2 = attn.transpose(0, 2, 1, 3).reshape(M, C)
    attn2p = jnp.pad(attn2, ((0, Mp - M), (0, 0))) if Mp != M else attn2

    # ---- 3) attn c_proj + residual + ln_2 + MLP + residual ----
    out2 = pl.pallas_call(
        _proj_res_ln_mlp_kernel,
        out_shape=jax.ShapeDtypeStruct((Mp, C), x.dtype),
        grid_spec=pltpu.PrefetchScalarGridSpec(
            num_scalar_prefetch=0,
            grid=(grid_rows,),
            in_specs=[
                row_spec_c,                      # attention output rows
                row_spec_c,                      # residual input rows (original x)
                full((C, C)), full((1, C)),      # attn c_proj
                full((1, C)), full((1, C)),      # ln_2 gamma / beta
                full((C, H4)), full((1, H4)),    # mlp c_fc
                full((H4, C)), full((1, C)),     # mlp c_proj
            ],
            out_specs=row_spec_c,
        ),
        compiler_params=pltpu.CompilerParams(
            dimension_semantics=("parallel",), vmem_limit_bytes=vmem_limit),
        cost_estimate=pl.CostEstimate(
            flops=2 * Mp * C * C + 4 * Mp * C * H4,
            transcendentals=Mp * H4 + Mp,
            bytes_accessed=(3 * Mp * C + C * C + 2 * C * H4 + 2 * C + H4 + 4 * C) * itemsize),
    )(attn2p, x2p,
      w_attn_proj, b_attn_proj.reshape(1, C),
      ln2_g.reshape(1, C), ln2_b.reshape(1, C),
      w_fc, b_fc.reshape(1, H4),
      w_proj, b_proj.reshape(1, C))

    return out2[:M].reshape(B, T, C)


# ---------------- Pure-JAX reference (matches the PyTorch Block forward) ----------------
def block_reference(x, ln1_g, ln1_b, w_attn, b_attn, w_attn_proj, b_attn_proj,
                    ln2_g, ln2_b, w_fc, b_fc, w_proj, b_proj, *, n_heads):
    B, T, C = x.shape
    hd = C // n_heads

    def ln(z, g, b):
        mu = z.mean(-1, keepdims=True)
        var = ((z - mu) ** 2).mean(-1, keepdims=True)
        return (z - mu) / jnp.sqrt(var + _LN_EPS) * g + b

    h = ln(x, ln1_g, ln1_b)
    qkv = h @ w_attn + b_attn
    q, k, v = jnp.split(qkv, 3, axis=-1)
    q = q.reshape(B, T, n_heads, hd).transpose(0, 2, 1, 3)
    k = k.reshape(B, T, n_heads, hd).transpose(0, 2, 1, 3)
    v = v.reshape(B, T, n_heads, hd).transpose(0, 2, 1, 3)
    s = jnp.einsum("bhtd,bhsd->bhts", q, k) / math.sqrt(hd)
    mask = jnp.tril(jnp.ones((T, T), dtype=bool))
    s = jnp.where(mask, s, -jnp.inf)
    p = jax.nn.softmax(s, axis=-1)
    o = jnp.einsum("bhts,bhsd->bhtd", p, v)
    o = o.transpose(0, 2, 1, 3).reshape(B, T, C)
    x = x + o @ w_attn_proj + b_attn_proj
    h2 = ln(x, ln2_g, ln2_b)
    m = h2 @ w_fc + b_fc
    m = jax.nn.gelu(m, approximate=True)
    return x + m @ w_proj + b_proj


if __name__ == "__main__":
    # Small GPT-2-style config: batch=2, seq=8, n_embed=32, n_heads=4
    B, T, C, NH = 2, 8, 32, 4
    H4 = 4 * C

    key = jax.random.PRNGKey(0)
    ks = jax.random.split(key, 13)
    x = jax.random.normal(ks[0], (B, T, C), dtype=jnp.float32)
    ln1_g = 1.0 + 0.1 * jax.random.normal(ks[1], (C,), dtype=jnp.float32)
    ln1_b = 0.1 * jax.random.normal(ks[2], (C,), dtype=jnp.float32)
    w_attn = jax.random.normal(ks[3], (C, 3 * C), dtype=jnp.float32) / math.sqrt(C)
    b_attn = 0.01 * jax.random.normal(ks[4], (3 * C,), dtype=jnp.float32)
    w_attn_proj = jax.random.normal(ks[5], (C, C), dtype=jnp.float32) / math.sqrt(C)
    b_attn_proj = 0.01 * jax.random.normal(ks[6], (C,), dtype=jnp.float32)
    ln2_g = 1.0 + 0.1 * jax.random.normal(ks[7], (C,), dtype=jnp.float32)
    ln2_b = 0.1 * jax.random.normal(ks[8], (C,), dtype=jnp.float32)
    w_fc = jax.random.normal(ks[9], (C, H4), dtype=jnp.float32) / math.sqrt(C)
    b_fc = 0.01 * jax.random.normal(ks[10], (H4,), dtype=jnp.float32)
    w_proj = jax.random.normal(ks[11], (H4, C), dtype=jnp.float32) / math.sqrt(H4)
    b_proj = 0.01 * jax.random.normal(ks[12], (C,), dtype=jnp.float32)

    args = (x, ln1_g, ln1_b, w_attn, b_attn, w_attn_proj, b_attn_proj,
            ln2_g, ln2_b, w_fc, b_fc, w_proj, b_proj)

    fwd = jax.jit(functools.partial(block_forward_pallas, n_heads=NH))
    out = jax.block_until_ready(fwd(*args))

    ref = block_reference(*args, n_heads=NH)
    assert out.shape == (B, T, C)
    assert jnp.allclose(out, ref, atol=2e-4, rtol=2e-4), "mismatch vs reference"

    print("KERNEL_OK")
</pallas_src>

<mosaic_0001>
module attributes {stable_mosaic.version = 11 : i64} {
  func.func @_ln_qkv_kernel(%arg0: i32, %arg1: memref<16x32xf32, #tpu.memory_space<vmem>>, %arg2: memref<1x32xf32, #tpu.memory_space<vmem>>, %arg3: memref<1x32xf32, #tpu.memory_space<vmem>>, %arg4: memref<32x96xf32, #tpu.memory_space<vmem>>, %arg5: memref<1x96xf32, #tpu.memory_space<vmem>>, %arg6: memref<16x96xf32, #tpu.memory_space<vmem>>) attributes {dimension_semantics = [#tpu.dimension_semantics<parallel>], iteration_bounds = array<i64: 1>, scalar_prefetch = 0 : i64, scratch_operands = 0 : i64, tpu.core_type = #tpu.core_type<tc>, window_params = [{transform_indices = @transform_0, window_bounds = array<i64: 16, 32>}, {pipeline_mode = #tpu.pipeline_mode<synchronous>, transform_indices = @transform_1, window_bounds = array<i64: 1, 32>}, {pipeline_mode = #tpu.pipeline_mode<synchronous>, transform_indices = @transform_2, window_bounds = array<i64: 1, 32>}, {pipeline_mode = #tpu.pipeline_mode<synchronous>, transform_indices = @transform_3, window_bounds = array<i64: 32, 96>}, {pipeline_mode = #tpu.pipeline_mode<synchronous>, transform_indices = @transform_4, window_bounds = array<i64: 1, 96>}, {transform_indices = @transform_5, window_bounds = array<i64: 16, 96>}]} {
    %c0 = arith.constant 0 : index
    %c0_0 = arith.constant 0 : index
    %0 = vector.load %arg1[%c0, %c0_0] : memref<16x32xf32, #tpu.memory_space<vmem>>, vector<16x32xf32>
    %c0_1 = arith.constant 0 : index
    %c0_2 = arith.constant 0 : index
    %1 = vector.load %arg2[%c0_1, %c0_2] : memref<1x32xf32, #tpu.memory_space<vmem>>, vector<1x32xf32>
    %c0_3 = arith.constant 0 : index
    %c0_4 = arith.constant 0 : index
    %2 = vector.load %arg3[%c0_3, %c0_4] : memref<1x32xf32, #tpu.memory_space<vmem>>, vector<1x32xf32>
    %cst = arith.constant dense<0.000000e+00> : vector<16xf32>
    %3 = vector.multi_reduction <add>, %0, %cst [1] : vector<16x32xf32> to vector<16xf32>
    %4 = vector.shape_cast %3 : vector<16xf32> to vector<16x1xf32>
    %cst_5 = arith.constant 3.200000e+01 : f32
    %5 = vector.broadcast %cst_5 : f32 to vector<16x1xf32>
    %6 = arith.divf %4, %5 : vector<16x1xf32>
    %7 = vector.broadcast %6 : vector<16x1xf32> to vector<16x32xf32>
    %8 = arith.subf %0, %7 : vector<16x32xf32>
    %9 = arith.mulf %8, %8 : vector<16x32xf32>
    %cst_6 = arith.constant dense<0.000000e+00> : vector<16xf32>
    %10 = vector.multi_reduction <add>, %9, %cst_6 [1] : vector<16x32xf32> to vector<16xf32>
    %11 = vector.shape_cast %10 : vector<16xf32> to vector<16x1xf32>
    %cst_7 = arith.constant 3.200000e+01 : f32
    %12 = vector.broadcast %cst_7 : f32 to vector<16x1xf32>
    %13 = arith.divf %11, %12 : vector<16x1xf32>
    %cst_8 = arith.constant 9.99999974E-6 : f32
    %14 = vector.broadcast %cst_8 : f32 to vector<16x1xf32>
    %15 = arith.addf %13, %14 : vector<16x1xf32>
    %16 = math.rsqrt %15 : vector<16x1xf32>
    %17 = vector.broadcast %16 : vector<16x1xf32> to vector<16x32xf32>
    %18 = arith.mulf %8, %17 : vector<16x32xf32>
    %19 = vector.broadcast %1 : vector<1x32xf32> to vector<16x32xf32>
    %20 = arith.mulf %18, %19 : vector<16x32xf32>
    %21 = vector.broadcast %2 : vector<1x32xf32> to vector<16x32xf32>
    %22 = arith.addf %20, %21 : vector<16x32xf32>
    %c0_9 = arith.constant 0 : index
    %c0_10 = arith.constant 0 : index
    %23 = vector.load %arg4[%c0_9, %c0_10] : memref<32x96xf32, #tpu.memory_space<vmem>>, vector<32x96xf32>
    %cst_11 = arith.constant dense<0.000000e+00> : vector<16x96xf32>
    %24 = tpu.matmul %22, %23, %cst_11 {dimension_numbers = #tpu.dot_dimension_numbers<[1], [0], [0], [1], [0, 0, 1, 1], [], []>} : vector<16x32xf32>, vector<32x96xf32>, vector<16x96xf32> -> vector<16x96xf32>
    %c0_12 = arith.constant 0 : index
    %c0_13 = arith.constant 0 : index
    %25 = vector.load %arg5[%c0_12, %c0_13] : memref<1x96xf32, #tpu.memory_space<vmem>>, vector<1x96xf32>
    %26 = vector.broadcast %25 : vector<1x96xf32> to vector<16x96xf32>
    %27 = arith.addf %24, %26 : vector<16x96xf32>
    %c0_14 = arith.constant 0 : index
    %c0_15 = arith.constant 0 : index
    %28 = vector.load %arg6[%c0_14, %c0_15] : memref<16x96xf32, #tpu.memory_space<vmem>>, vector<16x96xf32>
    tpu.vector_store %arg6[%c0_14, %c0_15], %27 {strides = array<i32>} : memref<16x96xf32, #tpu.memory_space<vmem>>, vector<16x96xf32>,
    return
  }
  func.func @transform_0(%arg0: i32) -> (i32, i32) {
    %c0_i32 = arith.constant 0 : i32
    %c0_i32_0 = arith.constant 0 : i32
    return %arg0, %c0_i32 : i32, i32
  }
  func.func @transform_1(%arg0: i32) -> (i32, i32) {
    %c0_i32 = arith.constant 0 : i32
    %c0_i32_0 = arith.constant 0 : i32
    %c0_i32_1 = arith.constant 0 : i32
    return %c0_i32, %c0_i32_0 : i32, i32
  }
  func.func @transform_2(%arg0: i32) -> (i32, i32) {
    %c0_i32 = arith.constant 0 : i32
    %c0_i32_0 = arith.constant 0 : i32
    %c0_i32_1 = arith.constant 0 : i32
    return %c0_i32, %c0_i32_0 : i32, i32
  }
  func.func @transform_3(%arg0: i32) -> (i32, i32) {
    %c0_i32 = arith.constant 0 : i32
    %c0_i32_0 = arith.constant 0 : i32
    %c0_i32_1 = arith.constant 0 : i32
    return %c0_i32, %c0_i32_0 : i32, i32
  }
  func.func @transform_4(%arg0: i32) -> (i32, i32) {
    %c0_i32 = arith.constant 0 : i32
    %c0_i32_0 = arith.constant 0 : i32
    %c0_i32_1 = arith.constant 0 : i32
    return %c0_i32, %c0_i32_0 : i32, i32
  }
  func.func @transform_5(%arg0: i32) -> (i32, i32) {
    %c0_i32 = arith.constant 0 : i32
    %c0_i32_0 = arith.constant 0 : i32
    return %arg0, %c0_i32 : i32, i32
  }
}

module attributes {stable_mosaic.version = 11 : i64} {
  func.func @_proj_res_ln_mlp_kernel(%arg0: i32, %arg1: memref<16x32xf32, #tpu.memory_space<vmem>>, %arg2: memref<16x32xf32, #tpu.memory_space<vmem>>, %arg3: memref<32x32xf32, #tpu.memory_space<vmem>>, %arg4: memref<1x32xf32, #tpu.memory_space<vmem>>, %arg5: memref<1x32xf32, #tpu.memory_space<vmem>>, %arg6: memref<1x32xf32, #tpu.memory_space<vmem>>, %arg7: memref<32x128xf32, #tpu.memory_space<vmem>>, %arg8: memref<1x128xf32, #tpu.memory_space<vmem>>, %arg9: memref<128x32xf32, #tpu.memory_space<vmem>>, %arg10: memref<1x32xf32, #tpu.memory_space<vmem>>, %arg11: memref<16x32xf32, #tpu.memory_space<vmem>>) attributes {dimension_semantics = [#tpu.dimension_semantics<parallel>], iteration_bounds = array<i64: 1>, scalar_prefetch = 0 : i64, scratch_operands = 0 : i64, tpu.core_type = #tpu.core_type<tc>, window_params = [{transform_indices = @transform_0, window_bounds = array<i64: 16, 32>}, {transform_indices = @transform_1, window_bounds = array<i64: 16, 32>}, {pipeline_mode = #tpu.pipeline_mode<synchronous>, transform_indices = @transform_2, window_bounds = array<i64: 32, 32>}, {pipeline_mode = #tpu.pipeline_mode<synchronous>, transform_indices = @transform_3, window_bounds = array<i64: 1, 32>}, {pipeline_mode = #tpu.pipeline_mode<synchronous>, transform_indices = @transform_4, window_bounds = array<i64: 1, 32>}, {pipeline_mode = #tpu.pipeline_mode<synchronous>, transform_indices = @transform_5, window_bounds = array<i64: 1, 32>}, {pipeline_mode = #tpu.pipeline_mode<synchronous>, transform_indices = @transform_6, window_bounds = array<i64: 32, 128>}, {pipeline_mode = #tpu.pipeline_mode<synchronous>, transform_indices = @transform_7, window_bounds = array<i64: 1, 128>}, {pipeline_mode = #tpu.pipeline_mode<synchronous>, transform_indices = @transform_8, window_bounds = array<i64: 128, 32>}, {pipeline_mode = #tpu.pipeline_mode<synchronous>, transform_indices = @transform_9, window_bounds = array<i64: 1, 32>}, {transform_indices = @transform_10, window_bounds = array<i64: 16, 32>}]} {
    %c0 = arith.constant 0 : index
    %c0_0 = arith.constant 0 : index
    %0 = vector.load %arg1[%c0, %c0_0] : memref<16x32xf32, #tpu.memory_space<vmem>>, vector<16x32xf32>
    %c0_1 = arith.constant 0 : index
    %c0_2 = arith.constant 0 : index
    %1 = vector.load %arg3[%c0_1, %c0_2] : memref<32x32xf32, #tpu.memory_space<vmem>>, vector<32x32xf32>
    %cst = arith.constant dense<0.000000e+00> : vector<16x32xf32>
    %2 = tpu.matmul %0, %1, %cst {dimension_numbers = #tpu.dot_dimension_numbers<[1], [0], [0], [1], [0, 0, 1, 1], [], []>} : vector<16x32xf32>, vector<32x32xf32>, vector<16x32xf32> -> vector<16x32xf32>
    %c0_3 = arith.constant 0 : index
    %c0_4 = arith.constant 0 : index
    %3 = vector.load %arg2[%c0_3, %c0_4] : memref<16x32xf32, #tpu.memory_space<vmem>>, vector<16x32xf32>
    %4 = arith.addf %3, %2 : vector<16x32xf32>
    %c0_5 = arith.constant 0 : index
    %c0_6 = arith.constant 0 : index
    %5 = vector.load %arg4[%c0_5, %c0_6] : memref<1x32xf32, #tpu.memory_space<vmem>>, vector<1x32xf32>
    %6 = vector.broadcast %5 : vector<1x32xf32> to vector<16x32xf32>
    %7 = arith.addf %4, %6 : vector<16x32xf32>
    %c0_7 = arith.constant 0 : index
    %c0_8 = arith.constant 0 : index
    %8 = vector.load %arg5[%c0_7, %c0_8] : memref<1x32xf32, #tpu.memory_space<vmem>>, vector<1x32xf32>
    %c0_9 = arith.constant 0 : index
    %c0_10 = arith.constant 0 : index
    %9 = vector.load %arg6[%c0_9, %c0_10] : memref<1x32xf32, #tpu.memory_space<vmem>>, vector<1x32xf32>
    %cst_11 = arith.constant dense<0.000000e+00> : vector<16xf32>
    %10 = vector.multi_reduction <add>, %7, %cst_11 [1] : vector<16x32xf32> to vector<16xf32>
    %11 = vector.shape_cast %10 : vector<16xf32> to vector<16x1xf32>
    %cst_12 = arith.constant 3.200000e+01 : f32
    %12 = vector.broadcast %cst_12 : f32 to vector<16x1xf32>
    %13 = arith.divf %11, %12 : vector<16x1xf32>
    %14 = vector.broadcast %13 : vector<16x1xf32> to vector<16x32xf32>
    %15 = arith.subf %7, %14 : vector<16x32xf32>
    %16 = arith.mulf %15, %15 : vector<16x32xf32>
    %cst_13 = arith.constant dense<0.000000e+00> : vector<16xf32>
    %17 = vector.multi_reduction <add>, %16, %cst_13 [1] : vector<16x32xf32> to vector<16xf32>
    %18 = vector.shape_cast %17 : vector<16xf32> to vector<16x1xf32>
    %cst_14 = arith.constant 3.200000e+01 : f32
    %19 = vector.broadcast %cst_14 : f32 to vector<16x1xf32>
    %20 = arith.divf %18, %19 : vector<16x1xf32>
    %cst_15 = arith.constant 9.99999974E-6 : f32
    %21 = vector.broadcast %cst_15 : f32 to vector<16x1xf32>
    %22 = arith.addf %20, %21 : vector<16x1xf32>
    %23 = math.rsqrt %22 : vector<16x1xf32>
    %24 = vector.broadcast %23 : vector<16x1xf32> to vector<16x32xf32>
    %25 = arith.mulf %15, %24 : vector<16x32xf32>
    %26 = vector.broadcast %8 : vector<1x32xf32> to vector<16x32xf32>
    %27 = arith.mulf %25, %26 : vector<16x32xf32>
    %28 = vector.broadcast %9 : vector<1x32xf32> to vector<16x32xf32>
    %29 = arith.addf %27, %28 : vector<16x32xf32>
    %c0_16 = arith.constant 0 : index
    %c0_17 = arith.constant 0 : index
    %30 = vector.load %arg7[%c0_16, %c0_17] : memref<32x128xf32, #tpu.memory_space<vmem>>, vector<32x128xf32>
    %cst_18 = arith.constant dense<0.000000e+00> : vector<16x128xf32>
    %31 = tpu.matmul %29, %30, %cst_18 {dimension_numbers = #tpu.dot_dimension_numbers<[1], [0], [0], [1], [0, 0, 1, 1], [], []>} : vector<16x32xf32>, vector<32x128xf32>, vector<16x128xf32> -> vector<16x128xf32>
    %c0_19 = arith.constant 0 : index
    %c0_20 = arith.constant 0 : index
    %32 = vector.load %arg8[%c0_19, %c0_20] : memref<1x128xf32, #tpu.memory_space<vmem>>, vector<1x128xf32>
    %33 = vector.broadcast %32 : vector<1x128xf32> to vector<16x128xf32>
    %34 = arith.addf %31, %33 : vector<16x128xf32>
    %cst_21 = arith.constant 5.000000e-01 : f32
    %35 = vector.broadcast %cst_21 : f32 to vector<16x128xf32>
    %36 = arith.mulf %35, %34 : vector<16x128xf32>
    %cst_22 = arith.constant 4.471500e-02 : f32
    %37 = vector.broadcast %cst_22 : f32 to vector<16x128xf32>
    %38 = arith.mulf %37, %34 : vector<16x128xf32>
    %39 = arith.mulf %38, %34 : vector<16x128xf32>
    %40 = arith.mulf %39, %34 : vector<16x128xf32>
    %41 = arith.addf %34, %40 : vector<16x128xf32>
    %cst_23 = arith.constant 0.797884583 : f32
    %42 = vector.broadcast %cst_23 : f32 to vector<16x128xf32>
    %43 = arith.mulf %42, %41 : vector<16x128xf32>
    %44 = math.tanh %43 : vector<16x128xf32>
    %cst_24 = arith.constant 1.000000e+00 : f32
    %45 = vector.broadcast %cst_24 : f32 to vector<16x128xf32>
    %46 = arith.addf %45, %44 : vector<16x128xf32>
    %47 = arith.mulf %36, %46 : vector<16x128xf32>
    %c0_25 = arith.constant 0 : index
    %c0_26 = arith.constant 0 : index
    %48 = vector.load %arg9[%c0_25, %c0_26] : memref<128x32xf32, #tpu.memory_space<vmem>>, vector<128x32xf32>
    %cst_27 = arith.constant dense<0.000000e+00> : vector<16x32xf32>
    %49 = tpu.matmul %47, %48, %cst_27 {dimension_numbers = #tpu.dot_dimension_numbers<[1], [0], [0], [1], [0, 0, 1, 1], [], []>} : vector<16x128xf32>, vector<128x32xf32>, vector<16x32xf32> -> vector<16x32xf32>
    %c0_28 = arith.constant 0 : index
    %c0_29 = arith.constant 0 : index
    %50 = vector.load %arg10[%c0_28, %c0_29] : memref<1x32xf32, #tpu.memory_space<vmem>>, vector<1x32xf32>
    %51 = vector.broadcast %50 : vector<1x32xf32> to vector<16x32xf32>
    %52 = arith.addf %49, %51 : vector<16x32xf32>
    %53 = arith.addf %52, %7 : vector<16x32xf32>
    %c0_30 = arith.constant 0 : index
    %c0_31 = arith.constant 0 : index
    %54 = vector.load %arg11[%c0_30, %c0_31] : memref<16x32xf32, #tpu.memory_space<vmem>>, vector<16x32xf32>
    tpu.vector_store %arg11[%c0_30, %c0_31], %53 {strides = array<i32>} : memref<16x32xf32, #tpu.memory_space<vmem>>, vector<16x32xf32>,
    return
  }
  func.func @transform_0(%arg0: i32) -> (i32, i32) {
    %c0_i32 = arith.constant 0 : i32
    %c0_i32_0 = arith.constant 0 : i32
    return %arg0, %c0_i32 : i32, i32
  }
  func.func @transform_1(%arg0: i32) -> (i32, i32) {
    %c0_i32 = arith.constant 0 : i32
    %c0_i32_0 = arith.constant 0 : i32
    return %arg0, %c0_i32 : i32, i32
  }
  func.func @transform_2(%arg0: i32) -> (i32, i32) {
    %c0_i32 = arith.constant 0 : i32
    %c0_i32_0 = arith.constant 0 : i32
    %c0_i32_1 = arith.constant 0 : i32
    return %c0_i32, %c0_i32_0 : i32, i32
  }
  func.func @transform_3(%arg0: i32) -> (i32, i32) {
    %c0_i32 = arith.constant 0 : i32
    %c0_i32_0 = arith.constant 0 : i32
    %c0_i32_1 = arith.constant 0 : i32
    return %c0_i32, %c0_i32_0 : i32, i32
  }
  func.func @transform_4(%arg0: i32) -> (i32, i32) {
    %c0_i32 = arith.constant 0 : i32
    %c0_i32_0 = arith.constant 0 : i32
    %c0_i32_1 = arith.constant 0 : i32
    return %c0_i32, %c0_i32_0 : i32, i32
  }
  func.func @transform_5(%arg0: i32) -> (i32, i32) {
    %c0_i32 = arith.constant 0 : i32
    %c0_i32_0 = arith.constant 0 : i32
    %c0_i32_1 = arith.constant 0 : i32
    return %c0_i32, %c0_i32_0 : i32, i32
  }
  func.func @transform_6(%arg0: i32) -> (i32, i32) {
    %c0_i32 = arith.constant 0 : i32
    %c0_i32_0 = arith.constant 0 : i32
    %c0_i32_1 = arith.constant 0 : i32
    return %c0_i32, %c0_i32_0 : i32, i32
  }
  func.func @transform_7(%arg0: i32) -> (i32, i32) {
    %c0_i32 = arith.constant 0 : i32
    %c0_i32_0 = arith.constant 0 : i32
    %c0_i32_1 = arith.constant 0 : i32
    return %c0_i32, %c0_i32_0 : i32, i32
  }
  func.func @transform_8(%arg0: i32) -> (i32, i32) {
    %c0_i32 = arith.constant 0 : i32
    %c0_i32_0 = arith.constant 0 : i32
    %c0_i32_1 = arith.constant 0 : i32
    return %c0_i32, %c0_i32_0 : i32, i32
  }
  func.func @transform_9(%arg0: i32) -> (i32, i32) {
    %c0_i32 = arith.constant 0 : i32
    %c0_i32_0 = arith.constant 0 : i32
    %c0_i32_1 = arith.constant 0 : i32
    return %c0_i32, %c0_i32_0 : i32, i32
  }
  func.func @transform_10(%arg0: i32) -> (i32, i32) {
    %c0_i32 = arith.constant 0 : i32
    %c0_i32_0 = arith.constant 0 : i32
    return %arg0, %c0_i32 : i32, i32
  }
}

module attributes {stable_mosaic.version = 11 : i64} {
  func.func @_causal_attn_kernel(%arg0: i32, %arg1: i32, %arg2: memref<1x1x8x8xf32, #tpu.memory_space<vmem>>, %arg3: memref<1x1x8x8xf32, #tpu.memory_space<vmem>>, %arg4: memref<1x1x8x8xf32, #tpu.memory_space<vmem>>, %arg5: memref<1x1x8x8xf32, #tpu.memory_space<vmem>>) attributes {dimension_semantics = [#tpu.dimension_semantics<parallel>, #tpu.dimension_semantics<parallel>], iteration_bounds = array<i64: 2, 4>, scalar_prefetch = 0 : i64, scratch_operands = 0 : i64, tpu.core_type = #tpu.core_type<tc>, window_params = [{transform_indices = @transform_0, window_bounds = array<i64: 1, 1, 8, 8>}, {transform_indices = @transform_1, window_bounds = array<i64: 1, 1, 8, 8>}, {transform_indices = @transform_2, window_bounds = array<i64: 1, 1, 8, 8>}, {transform_indices = @transform_3, window_bounds = array<i64: 1, 1, 8, 8>}]} {
    %c0 = arith.constant 0 : index
    %c0_0 = arith.constant 0 : index
    %c0_1 = arith.constant 0 : index
    %c0_2 = arith.constant 0 : index
    %0 = vector.load %arg2[%c0, %c0_0, %c0_1, %c0_2] : memref<1x1x8x8xf32, #tpu.memory_space<vmem>>, vector<1x1x8x8xf32>
    %1 = vector.shape_cast %0 : vector<1x1x8x8xf32> to vector<8x8xf32>
    %c0_3 = arith.constant 0 : index
    %c0_4 = arith.constant 0 : index
    %c0_5 = arith.constant 0 : index
    %c0_6 = arith.constant 0 : index
    %2 = vector.load %arg3[%c0_3, %c0_4, %c0_5, %c0_6] : memref<1x1x8x8xf32, #tpu.memory_space<vmem>>, vector<1x1x8x8xf32>
    %3 = vector.shape_cast %2 : vector<1x1x8x8xf32> to vector<8x8xf32>
    %c0_7 = arith.constant 0 : index
    %c0_8 = arith.constant 0 : index
    %c0_9 = arith.constant 0 : index
    %c0_10 = arith.constant 0 : index
    %4 = vector.load %arg4[%c0_7, %c0_8, %c0_9, %c0_10] : memref<1x1x8x8xf32, #tpu.memory_space<vmem>>, vector<1x1x8x8xf32>
    %5 = vector.shape_cast %4 : vector<1x1x8x8xf32> to vector<8x8xf32>
    %6 = tpu.transpose %3, [1, 0] : vector<8x8xf32> -> vector<8x8xf32>
    %cst = arith.constant dense<0.000000e+00> : vector<8x8xf32>
    %7 = tpu.matmul %1, %6, %cst {dimension_numbers = #tpu.dot_dimension_numbers<[1], [0], [0], [1], [0, 0, 1, 1], [], []>} : vector<8x8xf32>, vector<8x8xf32>, vector<8x8xf32> -> vector<8x8xf32>
    %cst_11 = arith.constant 0.353553385 : f32
    %8 = vector.broadcast %cst_11 : f32 to vector<8x8xf32>
    %9 = arith.mulf %7, %8 : vector<8x8xf32>
    %10 = tpu.iota {dimensions = array<i32: 0>} : vector<8x8xi32>
    %11 = tpu.iota {dimensions = array<i32: 1>} : vector<8x8xi32>
    %12 = arith.cmpi sle, %11, %10 : vector<8x8xi32>
    %cst_12 = arith.constant -1.000000e+30 : f32
    %13 = vector.broadcast %cst_12 : f32 to vector<8x8xf32>
    %14 = arith.select %12, %9, %13 : vector<8x8xi1>, vector<8x8xf32>
    %cst_13 = arith.constant dense<0xFF800000> : vector<8xf32>
    %15 = vector.multi_reduction <maximumf>, %14, %cst_13 [1] : vector<8x8xf32> to vector<8xf32>
    %16 = vector.shape_cast %15 : vector<8xf32> to vector<8x1xf32>
    %17 = vector.broadcast %16 : vector<8x1xf32> to vector<8x8xf32>
    %18 = arith.subf %14, %17 : vector<8x8xf32>
    %19 = math.exp %18 : vector<8x8xf32>
    %cst_14 = arith.constant dense<0.000000e+00> : vector<8xf32>
    %20 = vector.multi_reduction <add>, %19, %cst_14 [1] : vector<8x8xf32> to vector<8xf32>
    %21 = vector.shape_cast %20 : vector<8xf32> to vector<8x1xf32>
    %22 = vector.broadcast %21 : vector<8x1xf32> to vector<8x8xf32>
    %23 = arith.divf %19, %22 : vector<8x8xf32>
    %cst_15 = arith.constant dense<0.000000e+00> : vector<8x8xf32>
    %24 = tpu.matmul %23, %5, %cst_15 {dimension_numbers = #tpu.dot_dimension_numbers<[1], [0], [0], [1], [0, 0, 1, 1], [], []>} : vector<8x8xf32>, vector<8x8xf32>, vector<8x8xf32> -> vector<8x8xf32>
    %c0_16 = arith.constant 0 : index
    %c0_17 = arith.constant 0 : index
    %c0_18 = arith.constant 0 : index
    %c0_19 = arith.constant 0 : index
    %25 = vector.load %arg5[%c0_16, %c0_17, %c0_18, %c0_19] : memref<1x1x8x8xf32, #tpu.memory_space<vmem>>, vector<1x1x8x8xf32>
    %26 = vector.shape_cast %25 : vector<1x1x8x8xf32> to vector<8x8xf32>
    %27 = vector.shape_cast %24 : vector<8x8xf32> to vector<1x1x8x8xf32>
    tpu.vector_store %arg5[%c0_16, %c0_17, %c0_18, %c0_19], %27 {strides = array<i32>} : memref<1x1x8x8xf32, #tpu.memory_space<vmem>>, vector<1x1x8x8xf32>,
    return
  }
  func.func @transform_0(%arg0: i32, %arg1: i32) -> (i32, i32, i32, i32) {
    %c0_i32 = arith.constant 0 : i32
    %c0_i32_0 = arith.constant 0 : i32
    %c0_i32_1 = arith.constant 0 : i32
    return %arg0, %arg1, %c0_i32, %c0_i32_0 : i32, i32, i32, i32
  }
  func.func @transform_1(%arg0: i32, %arg1: i32) -> (i32, i32, i32, i32) {
    %c0_i32 = arith.constant 0 : i32
    %c0_i32_0 = arith.constant 0 : i32
    %c0_i32_1 = arith.constant 0 : i32
    return %arg0, %arg1, %c0_i32, %c0_i32_0 : i32, i32, i32, i32
  }
  func.func @transform_2(%arg0: i32, %arg1: i32) -> (i32, i32, i32, i32) {
    %c0_i32 = arith.constant 0 : i32
    %c0_i32_0 = arith.constant 0 : i32
    %c0_i32_1 = arith.constant 0 : i32
    return %arg0, %arg1, %c0_i32, %c0_i32_0 : i32, i32, i32, i32
  }
  func.func @transform_3(%arg0: i32, %arg1: i32) -> (i32, i32, i32, i32) {
    %c0_i32 = arith.constant 0 : i32
    %c0_i32_0 = arith.constant 0 : i32
    %c0_i32_1 = arith.constant 0 : i32
    return %arg0, %arg1, %c0_i32, %c0_i32_0 : i32, i32, i32, i32
  }
}

</mosaic_0001>

<llo_original>
// kernel: block_forward_pallas.3
$region0: #{block_forward_pallas.3}
  #allocation0 [shape = 'u32[]', space=smem, size = 0x4, offset = 0x4, fixed_abs, tag = 'smem constant byte address 0x4 - core index']
  #allocation1 [shape = 'u32[144,128]{1,0:T(1,128)}', space=vmem, size = 0x12000, scoped, tag = 'internal scratch']
  %s0 = inlined_call_operand.vmem [shape: f32[16,32], index: 0, kind: input, shape index: {}]
  %s1 = inlined_call_operand.vmem [shape: f32[1,32], index: 1, kind: input, shape index: {}]
  %s2 = inlined_call_operand.vmem [shape: f32[1,32], index: 2, kind: input, shape index: {}]
  %s3 = inlined_call_operand.hbm [shape: f32[32,96], index: 3, kind: input, shape index: {}]
  %s4 = inlined_call_operand.vmem [shape: f32[1,96], index: 4, kind: input, shape index: {}]
  %s5 = inlined_call_operand.vmem [shape: f32[16,96], index: 5, kind: output, shape index: {}]
  %s6 = sld [smem:[#allocation0]]
  $region34: #{block_forward_pallas.3} parent=0
    _
  %s8 = ssub.s32 1, %s6
  %s9 = scalar_select 0, %s8, %s6
  $region1: #{block_forward_pallas.3} parent=0
    #allocation2 [shape = 'u8[16384]{0}', space=vmem, size = 0x4000, scoped, tag = 'input window, operand 3, single buffered']
    #allocation3 [shape = 's32[1]{0}', space=sflag, size = 0x4, scoped, tag = 'scoped memory for block_forward_pallas.3']
    %10 = vsyncpa [#allocation3], 0
    // Predicated region
    $region2: #{block_forward_pallas.3} parent=1 // pred_check
      _
    $region3: #{block_forward_pallas.3} parent=1 // pred_check_branch
      %12 = sbr.rel (0) target = $region5
    $region4: #{block_forward_pallas.3} parent=1 // pred_region
      _
    $region5: #{block_forward_pallas.3} parent=1 // pred_fallthru
      _
    // Predicated region
    $region6: #{block_forward_pallas.3} parent=1 // pred_check
      _
    $region7: #{block_forward_pallas.3} parent=1 // pred_check_branch
      %14 = sbr.rel (0) target = $region9
    $region8: #{block_forward_pallas.3} parent=1 // pred_region
      _
    $region9: #{block_forward_pallas.3} parent=1 // pred_fallthru
      _
    // Predicated region
    $region10: #{block_forward_pallas.3} parent=1 // pred_check
      _
    $region11: #{block_forward_pallas.3} parent=1 // pred_check_branch
      %16 = sbr.rel (0) target = $region13
    $region12: #{block_forward_pallas.3} parent=1 // pred_region
      _
    $region13: #{block_forward_pallas.3} parent=1 // pred_fallthru
      _
    // Predicated region
    $region14: #{block_forward_pallas.3} parent=1 // pred_check
      _
    $region15: #{block_forward_pallas.3} parent=1 // pred_check_branch
      %18 = sbr.rel (0) target = $region17
    $region16: #{block_forward_pallas.3} parent=1 // pred_region
      %s20 = ssub.s32 512, 512
      %21 = vsyncadd [#allocation3], %s20
      %s22 = sshll.u32 [#allocation2], 4
      %s23 = int_to_ptr.vmem [resolvable:$true] %s22
      %28 = dma.hbm_to_vmem [thread:$0]  %s3, 512, %s23, [#allocation3], 128, 128, 8
    $region17: #{block_forward_pallas.3} parent=1 // pred_fallthru
      _
    // Predicated region
    $region18: #{block_forward_pallas.3} parent=1 // pred_check
      _
    $region19: #{block_forward_pallas.3} parent=1 // pred_check_branch
      %30 = sbr.rel (0) target = $region21
    $region20: #{block_forward_pallas.3} parent=1 // pred_region
      _
    $region21: #{block_forward_pallas.3} parent=1 // pred_fallthru
      _
    // Predicated region
    $region22: #{block_forward_pallas.3} parent=1 // pred_check
      _
    $region23: #{block_forward_pallas.3} parent=1 // pred_check_branch
      %32 = sbr.rel (0) target = $region25
    $region24: #{block_forward_pallas.3} parent=1 // pred_region
      %33 = dma.done [#allocation3], 512
    $region25: #{block_forward_pallas.3} parent=1 // pred_fallthru
      _
    %v34 = vld [vmem:[%s0] sm:$0xff]
    %v35 = vld [vmem:[%s0 + $0x8] sm:$0xff]
    %v36 = vld [vmem:[%s1] sm:$0x1]
    %v37 = vld [vmem:[%s2] sm:$0x1]
    %vm38 = vcmask 261120
    %v39 = vsel %vm38, %v34, 0.0
    %40 = vadd.xlane.f32.xlu0 %v39
    %v41 = vpop.xlane.xlu0 %40
    %v42 = vsel %vm38, %v35, 0.0
    %43 = vadd.xlane.f32.xlu0 %v42
    %v44 = vpop.xlane.xlu0 %43
    %v45 = vrcp.pop 32.0
    %v46 = vmul.f32 %v41, %v45
    %v47 = vmul.f32 %v44, %v45
    %v48 = vsub.f32 %v34, %v46
    %v49 = vsub.f32 %v35, %v47
    %v50 = vmul.f32 %v48, %v48
    %v51 = vmul.f32 %v49, %v49
    %v52 = vsel %vm38, %v50, 0.0
    %53 = vadd.xlane.f32.xlu0 %v52
    %v54 = vpop.xlane.xlu0 %53
    %v55 = vsel %vm38, %v51, 0.0
    %56 = vadd.xlane.f32.xlu0 %v55
    %v57 = vpop.xlane.xlu0 %56
    %v58 = vmul.f32 %v54, %v45
    %v59 = vmul.f32 %v57, %v45
    %v60 = vadd.f32 %v58, 1e-05
    %v61 = vadd.f32 %v59, 1e-05
    %v62 = vrsqrt.pop %v60
    %v63 = vrsqrt.pop %v61
    %v64 = vmul.f32 %v48, %v62
    %v65 = vmul.f32 %v49, %v63
    %v67 = vlaneseq
    %v68 = vshrl.u32 %v67, 7
    %v69 = vsub.s32 0, %v68
    %v70 = vrot.slane %v36, %v69
    %v72 = vmul.f32 %v64, %v70
    %v73 = vmul.f32 %v65, %v70
    %v75 = vlaneseq
    %v76 = vshrl.u32 %v75, 7
    %v77 = vsub.s32 0, %v76
    %v78 = vrot.slane %v37, %v77
    %v80 = vadd.f32 %v72, %v78
    %v81 = vadd.f32 %v73, %v78
    %v82 = vld [vmem:[#allocation2] sm:$0xff]
    %v83 = vld [vmem:[#allocation2 + $0x8] sm:$0xff]
    %v84 = vld [vmem:[#allocation2 + $0x10] sm:$0xff]
    %v85 = vld [vmem:[#allocation2 + $0x18] sm:$0xff]
    %v86 = vld [vmem:[%s4] sm:$0x1]
    %v88 = vlaneseq
    %v89 = vshrl.u32 %v88, 7
    %v90 = vsub.s32 0, %v89
    %v91 = vrot.slane %v86, %v90
    %v94 = vsel %vm38, %v80, 0
    %v97 = vsel %vm38, %v81, 0
    %99 = vmatprep.subr.mxu0 0.0
    %100 = vmatpush1.msra.mxu0 %v82
    %101 = vmatprep.subr.mxu0 0.0
    %102 = vmatpush1.msra.mxu0 %v83
    %103 = vmatprep.subr.mxu0 0.0
    %104 = vmatpush1.msra.mxu0 %v84
    %105 = vmatprep.subr.mxu0 0.0
    %106 = vmatpush1.msra.mxu0 %v85
    %107 = vmatprep.subr.mxu0 0.0
    %108 = vmatpush1.msra.mxu0 0.0
    %109 = vmatprep.subr.mxu0 0.0
    %110 = vmatpush1.msra.mxu0 0.0
    %111 = vmatprep.subr.mxu0 0.0
    %112 = vmatpush1.msra.mxu0 0.0
    %113 = vmatprep.subr.mxu0 0.0
    %114 = vmatpush1.msra.mxu0 0.0
    %115 = vmatprep.subr.mxu0 0.0
    %116 = vmatpush1.msra.mxu0 0.0
    %117 = vmatprep.subr.mxu0 0.0
    %118 = vmatpush1.msra.mxu0 0.0
    %119 = vmatprep.subr.mxu0 0.0
    %120 = vmatpush1.msra.mxu0 0.0
    %121 = vmatprep.subr.mxu0 0.0
    %122 = vmatpush1.msra.mxu0 0.0
    %123 = vmatprep.subr.mxu0 0.0
    %124 = vmatpush1.msra.mxu0 0.0
    %125 = vmatprep.subr.mxu0 0.0
    %126 = vmatpush1.msra.mxu0 0.0
    %127 = vmatprep.subr.mxu0 0.0
    %128 = vmatpush1.msra.mxu0 0.0
    %129 = vmatprep.subr.mxu0 0.0
    %130 = vmatpush1.msra.mxu0 0.0
    %131 = vmatprep.subr.mxu0 0.0
    %132 = vmatpush1.msra.mxu0 0.0
    %133 = vmatprep.subr.mxu0 0.0
    %134 = vmatpush1.msra.mxu0 0.0
    %135 = vmatprep.subr.mxu0 0.0
    %136 = vmatpush1.msra.mxu0 0.0
    %137 = vmatprep.subr.mxu0 0.0
    %138 = vmatpush1.msra.mxu0 0.0
    %139 = vmatprep.subr.mxu0 0.0
    %140 = vmatpush1.msra.mxu0 0.0
    %141 = vmatprep.subr.mxu0 0.0
    %142 = vmatpush1.msra.mxu0 0.0
    %143 = vmatprep.subr.mxu0 0.0
    %144 = vmatpush1.msra.mxu0 0.0
    %145 = vmatprep.subr.mxu0 0.0
    %146 = vmatpush1.msra.mxu0 0.0
    %147 = vmatprep.subr.mxu0 0.0
    %148 = vmatpush1.msra.mxu0 0.0
    %149 = vmatprep.subr.mxu0 0.0
    %150 = vmatpush1.msra.mxu0 0.0
    %151 = vmatprep.subr.mxu0 0.0
    %152 = vmatpush1.msra.mxu0 0.0
    %153 = vmatprep.subr.mxu0 0.0
    %154 = vmatpush1.msra.mxu0 0.0
    %155 = vmatprep.subr.mxu0 0.0
    %156 = vmatpush1.msra.mxu0 0.0
    %157 = vmatprep.subr.mxu0 0.0
    %158 = vmatpush1.msra.mxu0 0.0
    %159 = vmatprep.subr.mxu0 0.0
    %160 = vmatpush1.msra.mxu0 0.0
    %161 = vmatprep.subr.mxu0 0.0
    %162 = vmatpush1.msra.mxu0 0.0
    %163 = vmatprep.mubr.f32.mxu0 0.0
    %164 = vmatmul.mubr.f32.gmra.mrb[0].mxu0 %v94
    %v165 = vpop.f32.mrb[0].mxu0
    %v166 = vadd.f32 %v91, %v165
    %v167 = vpop.f32.mrb[0].mxu0
    %168 = vmatprep.mubr.f32.mxu0 0.0
    %169 = vmatmul.mubr.f32.gmra.mrb[0].mxu0 %v97
    %v170 = vpop.f32.mrb[0].mxu0
    %v171 = vadd.f32 %v91, %v170
    %v172 = vpop.f32.mrb[0].mxu0
    %173 = vdwg.mxu0
    %vm174 = vcmask 785408
    %175 = vst.msk [vmem:[%s5] sm:$0xff] %vm174, %v166
    %176 = vst.msk [vmem:[%s5 + $0x8] sm:$0xff] %vm174, %v171
    // Predicated region
    $region26: #{block_forward_pallas.3} parent=1 // pred_check
      _
    $region27: #{block_forward_pallas.3} parent=1 // pred_check_branch
      %178 = sbr.rel (0) target = $region29
    $region28: #{block_forward_pallas.3} parent=1 // pred_region
      _
    $region29: #{block_forward_pallas.3} parent=1 // pred_fallthru
      _
    // Predicated region
    $region30: #{block_forward_pallas.3} parent=1 // pred_check
      _
    $region31: #{block_forward_pallas.3} parent=1 // pred_check_branch
      %180 = sbr.rel (0) target = $region33
    $region32: #{block_forward_pallas.3} parent=1 // pred_region
      _
    $region33: #{block_forward_pallas.3} parent=1 // pred_fallthru
      _
    %181 = vsyncpa [#allocation3], 1

// kernel: block_forward_pallas.5
$region0: #{block_forward_pallas.5}
  #allocation0 [shape = 'u32[]', space=smem, size = 0x4, offset = 0x4, fixed_abs, tag = 'smem constant byte address 0x4 - core index']
  #allocation1 [shape = 'u32[144,128]{1,0:T(1,128)}', space=vmem, size = 0x12000, scoped, tag = 'internal scratch']
  %s0 = inlined_call_operand.vmem [shape: f32[16,32], index: 0, kind: input, shape index: {}]
  %s1 = inlined_call_operand.vmem [shape: f32[16,32], index: 1, kind: input, shape index: {}]
  %s2 = inlined_call_operand.vmem [shape: f32[32,32], index: 2, kind: input, shape index: {}]
  %s3 = inlined_call_operand.vmem [shape: f32[1,32], index: 3, kind: input, shape index: {}]
  %s4 = inlined_call_operand.vmem [shape: f32[1,32], index: 4, kind: input, shape index: {}]
  %s5 = inlined_call_operand.vmem [shape: f32[1,32], index: 5, kind: input, shape index: {}]
  %s6 = inlined_call_operand.vmem [shape: f32[32,128], index: 6, kind: input, shape index: {}]
  %s7 = inlined_call_operand.vmem [shape: f32[1,128], index: 7, kind: input, shape index: {}]
  %s8 = inlined_call_operand.vmem [shape: f32[128,32], index: 8, kind: input, shape index: {}]
  %s9 = inlined_call_operand.vmem [shape: f32[1,32], index: 9, kind: input, shape index: {}]
  %s10 = inlined_call_operand.hbm [shape: f32[16,32], index: 10, kind: output, shape index: {}]
  %s11 = sld [smem:[#allocation0]]
  $region50: #{block_forward_pallas.5} parent=0
    _
  %s13 = ssub.s32 1, %s11
  %s14 = scalar_select 0, %s13, %s11
  $region1: #{block_forward_pallas.5} parent=0
    #allocation2 [shape = 'u8[8192]{0}', space=vmem, size = 0x2000, scoped, tag = 'output window, operand 0, single buffered']
    #allocation3 [shape = 's32[1]{0}', space=sflag, size = 0x4, scoped, tag = 'scoped memory for block_forward_pallas.5']
    %15 = vsyncpa [#allocation3], 0
    // Predicated region
    $region2: #{block_forward_pallas.5} parent=1 // pred_check
      _
    $region3: #{block_forward_pallas.5} parent=1 // pred_check_branch
      %17 = sbr.rel (0) target = $region5
    $region4: #{block_forward_pallas.5} parent=1 // pred_region
      _
    $region5: #{block_forward_pallas.5} parent=1 // pred_fallthru
      _
    // Predicated region
    $region6: #{block_forward_pallas.5} parent=1 // pred_check
      _
    $region7: #{block_forward_pallas.5} parent=1 // pred_check_branch
      %19 = sbr.rel (0) target = $region9
    $region8: #{block_forward_pallas.5} parent=1 // pred_region
      _
    $region9: #{block_forward_pallas.5} parent=1 // pred_fallthru
      _
    // Predicated region
    $region10: #{block_forward_pallas.5} parent=1 // pred_check
      _
    $region11: #{block_forward_pallas.5} parent=1 // pred_check_branch
      %21 = sbr.rel (0) target = $region13
    $region12: #{block_forward_pallas.5} parent=1 // pred_region
      _
    $region13: #{block_forward_pallas.5} parent=1 // pred_fallthru
      _
    // Predicated region
    $region14: #{block_forward_pallas.5} parent=1 // pred_check
      _
    $region15: #{block_forward_pallas.5} parent=1 // pred_check_branch
      %23 = sbr.rel (0) target = $region17
    $region16: #{block_forward_pallas.5} parent=1 // pred_region
      _
    $region17: #{block_forward_pallas.5} parent=1 // pred_fallthru
      _
    // Predicated region
    $region18: #{block_forward_pallas.5} parent=1 // pred_check
      _
    $region19: #{block_forward_pallas.5} parent=1 // pred_check_branch
      %25 = sbr.rel (0) target = $region21
    $region20: #{block_forward_pallas.5} parent=1 // pred_region
      _
    $region21: #{block_forward_pallas.5} parent=1 // pred_fallthru
      _
    // Predicated region
    $region22: #{block_forward_pallas.5} parent=1 // pred_check
      _
    $region23: #{block_forward_pallas.5} parent=1 // pred_check_branch
      %27 = sbr.rel (0) target = $region25
    $region24: #{block_forward_pallas.5} parent=1 // pred_region
      _
    $region25: #{block_forward_pallas.5} parent=1 // pred_fallthru
      _
    // Predicated region
    $region26: #{block_forward_pallas.5} parent=1 // pred_check
      _
    $region27: #{block_forward_pallas.5} parent=1 // pred_check_branch
      %29 = sbr.rel (0) target = $region29
    $region28: #{block_forward_pallas.5} parent=1 // pred_region
      _
    $region29: #{block_forward_pallas.5} parent=1 // pred_fallthru
      _
    // Predicated region
    $region30: #{block_forward_pallas.5} parent=1 // pred_check
      _
    $region31: #{block_forward_pallas.5} parent=1 // pred_check_branch
      %31 = sbr.rel (0) target = $region33
    $region32: #{block_forward_pallas.5} parent=1 // pred_region
      _
    $region33: #{block_forward_pallas.5} parent=1 // pred_fallthru
      _
    // Predicated region
    $region34: #{block_forward_pallas.5} parent=1 // pred_check
      _
    $region35: #{block_forward_pallas.5} parent=1 // pred_check_branch
      %33 = sbr.rel (0) target = $region37
    $region36: #{block_forward_pallas.5} parent=1 // pred_region
      _
    $region37: #{block_forward_pallas.5} parent=1 // pred_fallthru
      _
    // Predicated region
    $region38: #{block_forward_pallas.5} parent=1 // pred_check
      _
    $region39: #{block_forward_pallas.5} parent=1 // pred_check_branch
      %35 = sbr.rel (0) target = $region41
    $region40: #{block_forward_pallas.5} parent=1 // pred_region
      _
    $region41: #{block_forward_pallas.5} parent=1 // pred_fallthru
      _
    %v36 = vld [vmem:[%s0] sm:$0xff]
    %v37 = vld [vmem:[%s0 + $0x8] sm:$0xff]
    %v38 = vld [vmem:[%s2] sm:$0xff]
    %v39 = vld [vmem:[%s2 + $0x8] sm:$0xff]
    %v40 = vld [vmem:[%s2 + $0x10] sm:$0xff]
    %v41 = vld [vmem:[%s2 + $0x18] sm:$0xff]
    %vm42 = vcmask 261120
    %v44 = vsel %vm42, %v36, 0
    %v47 = vsel %vm42, %v37, 0
    %49 = vmatprep.subr.mxu0 0.0
    %50 = vmatpush1.msra.mxu0 %v38
    %51 = vmatprep.subr.mxu0 0.0
    %52 = vmatpush1.msra.mxu0 %v39
    %53 = vmatprep.subr.mxu0 0.0
    %54 = vmatpush1.msra.mxu0 %v40
    %55 = vmatprep.subr.mxu0 0.0
    %56 = vmatpush1.msra.mxu0 %v41
    %57 = vmatprep.subr.mxu0 0.0
    %58 = vmatpush1.msra.mxu0 0.0
    %59 = vmatprep.subr.mxu0 0.0
    %60 = vmatpush1.msra.mxu0 0.0
    %61 = vmatprep.subr.mxu0 0.0
    %62 = vmatpush1.msra.mxu0 0.0
    %63 = vmatprep.subr.mxu0 0.0
    %64 = vmatpush1.msra.mxu0 0.0
    %65 = vmatprep.subr.mxu0 0.0
    %66 = vmatpush1.msra.mxu0 0.0
    %67 = vmatprep.subr.mxu0 0.0
    %68 = vmatpush1.msra.mxu0 0.0
    %69 = vmatprep.subr.mxu0 0.0
    %70 = vmatpush1.msra.mxu0 0.0
    %71 = vmatprep.subr.mxu0 0.0
    %72 = vmatpush1.msra.mxu0 0.0
    %73 = vmatprep.subr.mxu0 0.0
    %74 = vmatpush1.msra.mxu0 0.0
    %75 = vmatprep.subr.mxu0 0.0
    %76 = vmatpush1.msra.mxu0 0.0
    %77 = vmatprep.subr.mxu0 0.0
    %78 = vmatpush1.msra.mxu0 0.0
    %79 = vmatprep.subr.mxu0 0.0
    %80 = vmatpush1.msra.mxu0 0.0
    %81 = vmatprep.subr.mxu0 0.0
    %82 = vmatpush1.msra.mxu0 0.0
    %83 = vmatprep.subr.mxu0 0.0
    %84 = vmatpush1.msra.mxu0 0.0
    %85 = vmatprep.subr.mxu0 0.0
    %86 = vmatpush1.msra.mxu0 0.0
    %87 = vmatprep.subr.mxu0 0.0
    %88 = vmatpush1.msra.mxu0 0.0
    %89 = vmatprep.subr.mxu0 0.0
    %90 = vmatpush1.msra.mxu0 0.0
    %91 = vmatprep.subr.mxu0 0.0
    %92 = vmatpush1.msra.mxu0 0.0
    %93 = vmatprep.subr.mxu0 0.0
    %94 = vmatpush1.msra.mxu0 0.0
    %95 = vmatprep.subr.mxu0 0.0
    %96 = vmatpush1.msra.mxu0 0.0
    %97 = vmatprep.subr.mxu0 0.0
    %98 = vmatpush1.msra.mxu0 0.0
    %99 = vmatprep.subr.mxu0 0.0
    %100 = vmatpush1.msra.mxu0 0.0
    %101 = vmatprep.subr.mxu0 0.0
    %102 = vmatpush1.msra.mxu0 0.0
    %103 = vmatprep.subr.mxu0 0.0
    %104 = vmatpush1.msra.mxu0 0.0
    %105 = vmatprep.subr.mxu0 0.0
    %106 = vmatpush1.msra.mxu0 0.0
    %107 = vmatprep.subr.mxu0 0.0
    %108 = vmatpush1.msra.mxu0 0.0
    %109 = vmatprep.subr.mxu0 0.0
    %110 = vmatpush1.msra.mxu0 0.0
    %111 = vmatprep.subr.mxu0 0.0
    %112 = vmatpush1.msra.mxu0 0.0
    %113 = vmatprep.mubr.f32.mxu0 0.0
    %114 = vmatmul.mubr.f32.gmra.mrb[0].mxu0 %v44
    %v115 = vpop.f32.mrb[0].mxu0
    %v116 = vadd.f32 0.0, %v115
    %v117 = vpop.f32.mrb[0].mxu0
    %118 = vmatprep.mubr.f32.mxu0 0.0
    %119 = vmatmul.mubr.f32.gmra.mrb[0].mxu0 %v47
    %v120 = vpop.f32.mrb[0].mxu0
    %v121 = vadd.f32 0.0, %v120
    %v122 = vpop.f32.mrb[0].mxu0
    %123 = vdwg.mxu0
    %v124 = vld [vmem:[%s1] sm:$0xff]
    %v125 = vld [vmem:[%s1 + $0x8] sm:$0xff]
    %v126 = vadd.f32 %v124, %v116
    %v127 = vadd.f32 %v125, %v121
    %v128 = vld [vmem:[%s3] sm:$0x1]
    %v130 = vlaneseq
    %v131 = vshrl.u32 %v130, 7
    %v132 = vsub.s32 0, %v131
    %v133 = vrot.slane %v128, %v132
    %v135 = vadd.f32 %v126, %v133
    %v136 = vadd.f32 %v127, %v133
    %v137 = vld [vmem:[%s4] sm:$0x1]
    %v138 = vld [vmem:[%s5] sm:$0x1]
    %v139 = vsel %vm42, %v135, 0.0
    %140 = vadd.xlane.f32.xlu0 %v139
    %v141 = vpop.xlane.xlu0 %140
    %v142 = vsel %vm42, %v136, 0.0
    %143 = vadd.xlane.f32.xlu0 %v142
    %v144 = vpop.xlane.xlu0 %143
    %v145 = vrcp.pop 32.0
    %v146 = vmul.f32 %v141, %v145
    %v147 = vmul.f32 %v144, %v145
    %v148 = vsub.f32 %v135, %v146
    %v149 = vsub.f32 %v136, %v147
    %v150 = vmul.f32 %v148, %v148
    %v151 = vmul.f32 %v149, %v149
    %v152 = vsel %vm42, %v150, 0.0
    %153 = vadd.xlane.f32.xlu0 %v152
    %v154 = vpop.xlane.xlu0 %153
    %v155 = vsel %vm42, %v151, 0.0
    %156 = vadd.xlane.f32.xlu0 %v155
    %v157 = vpop.xlane.xlu0 %156
    %v158 = vmul.f32 %v154, %v145
    %v159 = vmul.f32 %v157, %v145
    %v160 = vadd.f32 %v158, 1e-05
    %v161 = vadd.f32 %v159, 1e-05
    %v162 = vrsqrt.pop %v160
    %v163 = vrsqrt.pop %v161
    %v164 = vmul.f32 %v148, %v162
    %v165 = vmul.f32 %v149, %v163
    %v167 = vlaneseq
    %v168 = vshrl.u32 %v167, 7
    %v169 = vsub.s32 0, %v168
    %v170 = vrot.slane %v137, %v169
    %v172 = vmul.f32 %v164, %v170
    %v173 = vmul.f32 %v165, %v170
    %v175 = vlaneseq
    %v176 = vshrl.u32 %v175, 7
    %v177 = vsub.s32 0, %v176
    %v178 = vrot.slane %v138, %v177
    %v180 = vadd.f32 %v172, %v178
    %v181 = vadd.f32 %v173, %v178
    %v182 = vld [vmem:[%s6] sm:$0xff]
    %v183 = vld [vmem:[%s6 + $0x8] sm:$0xff]
    %v184 = vld [vmem:[%s6 + $0x10] sm:$0xff]
    %v185 = vld [vmem:[%s6 + $0x18] sm:$0xff]
    %v186 = vld [vmem:[%s7] sm:$0x1]
    %v188 = vlaneseq
    %v189 = vshrl.u32 %v188, 7
    %v190 = vsub.s32 0, %v189
    %v191 = vrot.slane %v186, %v190
    %v194 = vsel %vm42, %v180, 0
    %v197 = vsel %vm42, %v181, 0
    %199 = vmatprep.subr.mxu0 0.0
    %200 = vmatpush1.msra.mxu0 %v182
    %201 = vmatprep.subr.mxu0 0.0
    %202 = vmatpush1.msra.mxu0 %v183
    %203 = vmatprep.subr.mxu0 0.0
    %204 = vmatpush1.msra.mxu0 %v184
    %205 = vmatprep.subr.mxu0 0.0
    %206 = vmatpush1.msra.mxu0 %v185
    %207 = vmatprep.subr.mxu0 0.0
    %208 = vmatpush1.msra.mxu0 0.0
    %209 = vmatprep.subr.mxu0 0.0
    %210 = vmatpush1.msra.mxu0 0.0
    %211 = vmatprep.subr.mxu0 0.0
    %212 = vmatpush1.msra.mxu0 0.0
    %213 = vmatprep.subr.mxu0 0.0
    %214 = vmatpush1.msra.mxu0 0.0
    %215 = vmatprep.subr.mxu0 0.0
    %216 = vmatpush1.msra.mxu0 0.0
    %217 = vmatprep.subr.mxu0 0.0
    %218 = vmatpush1.msra.mxu0 0.0
    %219 = vmatprep.subr.mxu0 0.0
    %220 = vmatpush1.msra.mxu0 0.0
    %221 = vmatprep.subr.mxu0 0.0
    %222 = vmatpush1.msra.mxu0 0.0
    %223 = vmatprep.subr.mxu0 0.0
    %224 = vmatpush1.msra.mxu0 0.0
    %225 = vmatprep.subr.mxu0 0.0
    %226 = vmatpush1.msra.mxu0 0.0
    %227 = vmatprep.subr.mxu0 0.0
    %228 = vmatpush1.msra.mxu0 0.0
    %229 = vmatprep.subr.mxu0 0.0
    %230 = vmatpush1.msra.mxu0 0.0
    %231 = vmatprep.subr.mxu0 0.0
    %232 = vmatpush1.msra.mxu0 0.0
    %233 = vmatprep.subr.mxu0 0.0
    %234 = vmatpush1.msra.mxu0 0.0
    %235 = vmatprep.subr.mxu0 0.0
    %236 = vmatpush1.msra.mxu0 0.0
    %237 = vmatprep.subr.mxu0 0.0
    %238 = vmatpush1.msra.mxu0 0.0
    %239 = vmatprep.subr.mxu0 0.0
    %240 = vmatpush1.msra.mxu0 0.0
    %241 = vmatprep.subr.mxu0 0.0
    %242 = vmatpush1.msra.mxu0 0.0
    %243 = vmatprep.subr.mxu0 0.0
    %244 = vmatpush1.msra.mxu0 0.0
    %245 = vmatprep.subr.mxu0 0.0
    %246 = vmatpush1.msra.mxu0 0.0
    %247 = vmatprep.subr.mxu0 0.0
    %248 = vmatpush1.msra.mxu0 0.0
    %249 = vmatprep.subr.mxu0 0.0
    %250 = vmatpush1.msra.mxu0 0.0
    %251 = vmatprep.subr.mxu0 0.0
    %252 = vmatpush1.msra.mxu0 0.0
    %253 = vmatprep.subr.mxu0 0.0
    %254 = vmatpush1.msra.mxu0 0.0
    %255 = vmatprep.subr.mxu0 0.0
    %256 = vmatpush1.msra.mxu0 0.0
    %257 = vmatprep.subr.mxu0 0.0
    %258 = vmatpush1.msra.mxu0 0.0
    %259 = vmatprep.subr.mxu0 0.0
    %260 = vmatpush1.msra.mxu0 0.0
    %261 = vmatprep.subr.mxu0 0.0
    %262 = vmatpush1.msra.mxu0 0.0
    %263 = vmatprep.mubr.f32.mxu0 0.0
    %264 = vmatmul.mubr.f32.gmra.mrb[0].mxu0 %v194
    %v265 = vpop.f32.mrb[0].mxu0
    %v266 = vadd.f32 %v191, %v265
    %v267 = vpop.f32.mrb[0].mxu0
    %268 = vmatprep.mubr.f32.mxu0 0.0
    %269 = vmatmul.mubr.f32.gmra.mrb[0].mxu0 %v197
    %v270 = vpop.f32.mrb[0].mxu0
    %v271 = vadd.f32 %v191, %v270
    %v272 = vpop.f32.mrb[0].mxu0
    %273 = vdwg.mxu0
    %v274 = vmul.f32 %v266, 0.5
    %v275 = vmul.f32 %v271, 0.5
    %v276 = vmul.f32 %v266, 0.044715
    %v277 = vmul.f32 %v271, 0.044715
    %v278 = vmul.f32 %v276, %v266
    %v279 = vmul.f32 %v277, %v271
    %v280 = vmul.f32 %v278, %v266
    %v281 = vmul.f32 %v279, %v271
    %v282 = vadd.f32 %v266, %v280
    %v283 = vadd.f32 %v271, %v281
    %v284 = vmul.f32 %v282, 0.7978846
    %v285 = vmul.f32 %v283, 0.7978846
    %v286 = vtanh.pop %v284
    %v287 = vtanh.pop %v285
    %v288 = vadd.f32 %v286, 1.0
    %v289 = vadd.f32 %v287, 1.0
    %v290 = vmul.f32 %v274, %v288
    %v291 = vmul.f32 %v275, %v289
    %v292 = vld [vmem:[%s8] sm:$0xff]
    %v293 = vld [vmem:[%s8 + $0x8] sm:$0xff]
    %v294 = vld [vmem:[%s8 + $0x10] sm:$0xff]
    %v295 = vld [vmem:[%s8 + $0x18] sm:$0xff]
    %v296 = vld [vmem:[%s8 + $0x20] sm:$0xff]
    %v297 = vld [vmem:[%s8 + $0x28] sm:$0xff]
    %v298 = vld [vmem:[%s8 + $0x30] sm:$0xff]
    %v299 = vld [vmem:[%s8 + $0x38] sm:$0xff]
    %v300 = vld [vmem:[%s8 + $0x40] sm:$0xff]
    %v301 = vld [vmem:[%s8 + $0x48] sm:$0xff]
    %v302 = vld [vmem:[%s8 + $0x50] sm:$0xff]
    %v303 = vld [vmem:[%s8 + $0x58] sm:$0xff]
    %v304 = vld [vmem:[%s8 + $0x60] sm:$0xff]
    %v305 = vld [vmem:[%s8 + $0x68] sm:$0xff]
    %v306 = vld [vmem:[%s8 + $0x70] sm:$0xff]
    %v307 = vld [vmem:[%s8 + $0x78] sm:$0xff]
    %v308 = vld [vmem:[%s9] sm:$0x1]
    %v310 = vlaneseq
    %v311 = vshrl.u32 %v310, 7
    %v312 = vsub.s32 0, %v311
    %v313 = vrot.slane %v308, %v312
    %315 = vmatprep.subr.mxu0 0.0
    %316 = vmatpush1.msra.mxu0 %v292
    %317 = vmatprep.subr.mxu0 0.0
    %318 = vmatpush1.msra.mxu0 %v293
    %319 = vmatprep.subr.mxu0 0.0
    %320 = vmatpush1.msra.mxu0 %v294
    %321 = vmatprep.subr.mxu0 0.0
    %322 = vmatpush1.msra.mxu0 %v295
    %323 = vmatprep.subr.mxu0 0.0
    %324 = vmatpush1.msra.mxu0 %v296
    %325 = vmatprep.subr.mxu0 0.0
    %326 = vmatpush1.msra.mxu0 %v297
    %327 = vmatprep.subr.mxu0 0.0
    %328 = vmatpush1.msra.mxu0 %v298
    %329 = vmatprep.subr.mxu0 0.0
    %330 = vmatpush1.msra.mxu0 %v299
    %331 = vmatprep.subr.mxu0 0.0
    %332 = vmatpush1.msra.mxu0 %v300
    %333 = vmatprep.subr.mxu0 0.0
    %334 = vmatpush1.msra.mxu0 %v301
    %335 = vmatprep.subr.mxu0 0.0
    %336 = vmatpush1.msra.mxu0 %v302
    %337 = vmatprep.subr.mxu0 0.0
    %338 = vmatpush1.msra.mxu0 %v303
    %339 = vmatprep.subr.mxu0 0.0
    %340 = vmatpush1.msra.mxu0 %v304
    %341 = vmatprep.subr.mxu0 0.0
    %342 = vmatpush1.msra.mxu0 %v305
    %343 = vmatprep.subr.mxu0 0.0
    %344 = vmatpush1.msra.mxu0 %v306
    %345 = vmatprep.subr.mxu0 0.0
    %346 = vmatpush1.msra.mxu0 %v307
    %347 = vmatprep.subr.mxu0 0.0
    %348 = vmatpush1.msra.mxu0 0.0
    %349 = vmatprep.subr.mxu0 0.0
    %350 = vmatpush1.msra.mxu0 0.0
    %351 = vmatprep.subr.mxu0 0.0
    %352 = vmatpush1.msra.mxu0 0.0
    %353 = vmatprep.subr.mxu0 0.0
    %354 = vmatpush1.msra.mxu0 0.0
    %355 = vmatprep.subr.mxu0 0.0
    %356 = vmatpush1.msra.mxu0 0.0
    %357 = vmatprep.subr.mxu0 0.0
    %358 = vmatpush1.msra.mxu0 0.0
    %359 = vmatprep.subr.mxu0 0.0
    %360 = vmatpush1.msra.mxu0 0.0
    %361 = vmatprep.subr.mxu0 0.0
    %362 = vmatpush1.msra.mxu0 0.0
    %363 = vmatprep.subr.mxu0 0.0
    %364 = vmatpush1.msra.mxu0 0.0
    %365 = vmatprep.subr.mxu0 0.0
    %366 = vmatpush1.msra.mxu0 0.0
    %367 = vmatprep.subr.mxu0 0.0
    %368 = vmatpush1.msra.mxu0 0.0
    %369 = vmatprep.subr.mxu0 0.0
    %370 = vmatpush1.msra.mxu0 0.0
    %371 = vmatprep.subr.mxu0 0.0
    %372 = vmatpush1.msra.mxu0 0.0
    %373 = vmatprep.subr.mxu0 0.0
    %374 = vmatpush1.msra.mxu0 0.0
    %375 = vmatprep.subr.mxu0 0.0
    %376 = vmatpush1.msra.mxu0 0.0
    %377 = vmatprep.subr.mxu0 0.0
    %378 = vmatpush1.msra.mxu0 0.0
    %379 = vmatprep.mubr.f32.mxu0 0.0
    %380 = vmatmul.mubr.f32.gmra.mrb[0].mxu0 %v290
    %v381 = vpop.f32.mrb[0].mxu0
    %v382 = vadd.f32 %v313, %v381
    %v383 = vpop.f32.mrb[0].mxu0
    %384 = vmatprep.mubr.f32.mxu0 0.0
    %385 = vmatmul.mubr.f32.gmra.mrb[0].mxu0 %v291
    %v386 = vpop.f32.mrb[0].mxu0
    %v387 = vadd.f32 %v313, %v386
    %v388 = vpop.f32.mrb[0].mxu0
    %389 = vdwg.mxu0
    %v390 = vadd.f32 %v382, %v135
    %v391 = vadd.f32 %v387, %v136
    %392 = vst.msk [vmem:[#allocation2] sm:$0xff] %vm42, %v390
    %393 = vst.msk [vmem:[#allocation2 + $0x8] sm:$0xff] %vm42, %v391
    // Predicated region
    $region42: #{block_forward_pallas.5} parent=1 // pred_check
      _
    $region43: #{block_forward_pallas.5} parent=1 // pred_check_branch
      %395 = sbr.rel (0) target = $region45
    $region44: #{block_forward_pallas.5} parent=1 // pred_region
      %s397 = ssub.s32 256, 256
      %398 = vsyncadd [#allocation3], %s397
      %s399 = sshll.u32 [#allocation2], 4
      %s400 = int_to_ptr.vmem [resolvable:$true] %s399
      %405 = dma.vmem_to_hbm [thread:$0]  %s400, 256, %s10, [#allocation3], 128, 128, 8
    $region45: #{block_forward_pallas.5} parent=1 // pred_fallthru
      _
    // Predicated region
    $region46: #{block_forward_pallas.5} parent=1 // pred_check
      _
    $region47: #{block_forward_pallas.5} parent=1 // pred_check_branch
      %407 = sbr.rel (0) target = $region49
    $region48: #{block_forward_pallas.5} parent=1 // pred_region
      %408 = dma.done [#allocation3], 256
    $region49: #{block_forward_pallas.5} parent=1 // pred_fallthru
      _
    %409 = vsyncpa [#allocation3], 1

// kernel: block_forward_pallas.4
$region0: #{block_forward_pallas.4}
  #allocation0 [shape = 'u32[]', space=smem, size = 0x4, offset = 0x4, fixed_abs, tag = 'smem constant byte address 0x4 - core index']
  #allocation1 [shape = 'u32[144,128]{1,0:T(1,128)}', space=vmem, size = 0x12000, scoped, tag = 'internal scratch']
  %s0 = inlined_call_operand.vmem [shape: f32[2,4,8,8], index: 0, kind: input, shape index: {}]
  %s1 = inlined_call_operand.vmem [shape: f32[2,4,8,8], index: 1, kind: input, shape index: {}]
  %s2 = inlined_call_operand.vmem [shape: f32[2,4,8,8], index: 2, kind: input, shape index: {}]
  %s3 = inlined_call_operand.vmem [shape: f32[2,4,8,8], index: 3, kind: output, shape index: {}]
  %s4 = sld [smem:[#allocation0]]
  $region45: #{block_forward_pallas.4} parent=0
    _
  %s6 = ssub.s32 1, %s4
  %s7 = scalar_select 0, %s6, %s4
  loop: start=0, step=1, limit=10
  $region2: #{block_forward_pallas.4} parent=0 // loop_pre_header
    _
  $region3: #{block_forward_pallas.4} parent=0 // loop_header
    %s9 = sphi 0, %s13
    %p10 = scmp.ge.s32.totalorder %s9, 10
    %s16 = sphi 0, %s28
    %s17 = sphi 0, %s24
    %s18 = sphi 0, %s16
    %s19 = sphi 0, %s17
    %s20 = sphi 0, %s18
    %s21 = sphi 0, %s19
    %s33 = sphi 0, %s35
    %s36 = sphi 0, %s33
    %s37 = sphi 0, %s36
    %s53 = sphi 0, %s37
    %s61 = sphi 0, %s63
    %s64 = sphi 0, %s61
    %s65 = sphi 0, %s64
    %s81 = sphi 0, %s65
    %s89 = sphi 0, %s91
    %s92 = sphi 0, %s89
    %s93 = sphi 0, %s92
    %s109 = sphi 0, %s93
    %s117 = sphi 0, %s119
    %s120 = sphi 0, %s117
    %s121 = sphi 0, %s120
    %s137 = sphi 0, %s121
  $region4: #{block_forward_pallas.4} parent=0 // loop_header_branch
    %12 = sbr.rel (%p10) target = $region8
  $region5: #{block_forward_pallas.4} parent=0 // loop_body
    %s14 = ssub.s32 %s9, 1
    %s15 = ssub.s32 %s9, 2
    %s22 = sadd.s32 1, %s17
    %p23 = scmp.ge.s32.totalorder %s22, 4
    %s24 = scalar_select %p23, 0, %s22
    %s25 = sadd.s32 1, %s16
    %s26 = scalar_select %p23, %s25, %s16
    %p27 = scmp.ge.s32.totalorder %s26, 2
    %s28 = scalar_select %p27, 0, %s26
    %s29 = ssub.s32 %s16, %s28
    %s30 = ssub.s32 %s17, %s24
    %s31 = sor.u32 %s29, %s30
    %p32 = scmp.eq.s32.totalorder %s31, 0
    %s34 = sadd.s32 %s33, 1
    %s35 = scalar_select %p32, %s33, %s34
    %p38 = pneg %p32
    %p39 = scmp.eq.s32.totalorder %s9, 7
    %p40 = por %p38, %p39
    %p41 = scmp.ne.s32.totalorder %s33, %s36
    %p42 = scmp.eq.s32.totalorder %s9, 0
    %p43 = por %p41, %p42
    %p44 = scmp.ne.s32.totalorder %s33, %s36
    %p45 = scmp.eq.s32.totalorder %s14, 7
    %p46 = por %p44, %p45
    %p47 = scmp.ne.s32.totalorder %s36, %s37
    %p48 = scmp.eq.s32.totalorder %s14, 0
    %p49 = por %p47, %p48
    %p50 = scmp.ne.s32.totalorder %s36, %s37
    %p51 = scmp.eq.s32.totalorder %s15, 7
    %p52 = por %p50, %p51
    %p54 = scmp.ne.s32.totalorder %s37, %s53
    %p55 = scmp.eq.s32.totalorder %s15, 0
    %p56 = por %p54, %p55
    %s57 = ssub.s32 %s16, %s28
    %s58 = ssub.s32 %s17, %s24
    %s59 = sor.u32 %s57, %s58
    %p60 = scmp.eq.s32.totalorder %s59, 0
    %s62 = sadd.s32 %s61, 1
    %s63 = scalar_select %p60, %s61, %s62
    %p66 = pneg %p60
    %p67 = scmp.eq.s32.totalorder %s9, 7
    %p68 = por %p66, %p67
    %p69 = scmp.ne.s32.totalorder %s61, %s64
    %p70 = scmp.eq.s32.totalorder %s9, 0
    %p71 = por %p69, %p70
    %p72 = scmp.ne.s32.totalorder %s61, %s64
    %p73 = scmp.eq.s32.totalorder %s14, 7
    %p74 = por %p72, %p73
    %p75 = scmp.ne.s32.totalorder %s64, %s65
    %p76 = scmp.eq.s32.totalorder %s14, 0
    %p77 = por %p75, %p76
    %p78 = scmp.ne.s32.totalorder %s64, %s65
    %p79 = scmp.eq.s32.totalorder %s15, 7
    %p80 = por %p78, %p79
    %p82 = scmp.ne.s32.totalorder %s65, %s81
    %p83 = scmp.eq.s32.totalorder %s15, 0
    %p84 = por %p82, %p83
    %s85 = ssub.s32 %s16, %s28
    %s86 = ssub.s32 %s17, %s24
    %s87 = sor.u32 %s85, %s86
    %p88 = scmp.eq.s32.totalorder %s87, 0
    %s90 = sadd.s32 %s89, 1
    %s91 = scalar_select %p88, %s89, %s90
    %p94 = pneg %p88
    %p95 = scmp.eq.s32.totalorder %s9, 7
    %p96 = por %p94, %p95
    %p97 = scmp.ne.s32.totalorder %s89, %s92
    %p98 = scmp.eq.s32.totalorder %s9, 0
    %p99 = por %p97, %p98
    %p100 = scmp.ne.s32.totalorder %s89, %s92
    %p101 = scmp.eq.s32.totalorder %s14, 7
    %p102 = por %p100, %p101
    %p103 = scmp.ne.s32.totalorder %s92, %s93
    %p104 = scmp.eq.s32.totalorder %s14, 0
    %p105 = por %p103, %p104
    %p106 = scmp.ne.s32.totalorder %s92, %s93
    %p107 = scmp.eq.s32.totalorder %s15, 7
    %p108 = por %p106, %p107
    %p110 = scmp.ne.s32.totalorder %s93, %s109
    %p111 = scmp.eq.s32.totalorder %s15, 0
    %p112 = por %p110, %p111
    %s113 = ssub.s32 %s16, %s28
    %s114 = ssub.s32 %s17, %s24
    %s115 = sor.u32 %s113, %s114
    %p116 = scmp.eq.s32.totalorder %s115, 0
    %s118 = sadd.s32 %s117, 1
    %s119 = scalar_select %p116, %s117, %s118
    %p122 = pneg %p116
    %p123 = scmp.eq.s32.totalorder %s9, 7
    %p124 = por %p122, %p123
    %p125 = scmp.ne.s32.totalorder %s117, %s120
    %p126 = scmp.eq.s32.totalorder %s9, 0
    %p127 = por %p125, %p126
    %p128 = scmp.ne.s32.totalorder %s117, %s120
    %p129 = scmp.eq.s32.totalorder %s14, 7
    %p130 = por %p128, %p129
    %p131 = scmp.ne.s32.totalorder %s120, %s121
    %p132 = scmp.eq.s32.totalorder %s14, 0
    %p133 = por %p131, %p132
    %p134 = scmp.ne.s32.totalorder %s120, %s121
    %p135 = scmp.eq.s32.totalorder %s15, 7
    %p136 = por %p134, %p135
    %p138 = scmp.ne.s32.totalorder %s121, %s137
    %p139 = scmp.eq.s32.totalorder %s15, 0
    %p140 = por %p138, %p139
    %p141 = scmp.le.s32.totalorder 1, %s9
    %p142 = scmp.lt.s32.totalorder %s9, 9
    %p143 = pnand %p141, %p142
    %p144 = pneg %p143
    // Predicated region
    $region9: #{block_forward_pallas.4} parent=5 // pred_check
      _
    $region10: #{block_forward_pallas.4} parent=5 // pred_check_branch
      %146 = sbr.rel (%p143) target = $region12
    $region11: #{block_forward_pallas.4} parent=5 // pred_region
      %s147 = ssub.s32 %s9, 1
    $region12: #{block_forward_pallas.4} parent=5 // pred_fallthru
      _
    %p148 = scmp.lt.s32.totalorder %s9, 8
    // Predicated region
    $region13: #{block_forward_pallas.4} parent=5 // pred_check
      %p149 = pneg %p148
    $region14: #{block_forward_pallas.4} parent=5 // pred_check_branch
      %151 = sbr.rel (%p149) target = $region16
    $region15: #{block_forward_pallas.4} parent=5 // pred_region
      // Predicated region
      $region17: #{block_forward_pallas.4} parent=15 // pred_check
        %p152 = pneg %p43
      $region18: #{block_forward_pallas.4} parent=15 // pred_check_branch
        %154 = sbr.rel (%p152) target = $region20
      $region19: #{block_forward_pallas.4} parent=15 // pred_region
        %p155 = scmp.lt.s32.totalorder %s16, 1
        %s156 = scalar_select %p155, %s16, 1
        %p157 = scmp.lt.s32.totalorder %s17, 3
        %s158 = scalar_select %p157, %s17, 3
        %s159 = smul.addr %s156, 4
        %s160 = sadd.s32 %s158, %s159
        %s161 = smul.addr %s160, 8
        %s162 = scalar_lea.vmem %s0, %s161
      $region20: #{block_forward_pallas.4} parent=15 // pred_fallthru
        _
      // Predicated region
      $region21: #{block_forward_pallas.4} parent=15 // pred_check
        %p163 = pneg %p71
      $region22: #{block_forward_pallas.4} parent=15 // pred_check_branch
        %165 = sbr.rel (%p163) target = $region24
      $region23: #{block_forward_pallas.4} parent=15 // pred_region
        %p166 = scmp.lt.s32.totalorder %s16, 1
        %s167 = scalar_select %p166, %s16, 1
        %p168 = scmp.lt.s32.totalorder %s17, 3
        %s169 = scalar_select %p168, %s17, 3
        %s170 = smul.addr %s167, 4
        %s171 = sadd.s32 %s169, %s170
        %s172 = smul.addr %s171, 8
        %s173 = scalar_lea.vmem %s1, %s172
      $region24: #{block_forward_pallas.4} parent=15 // pred_fallthru
        _
      // Predicated region
      $region25: #{block_forward_pallas.4} parent=15 // pred_check
        %p174 = pneg %p99
      $region26: #{block_forward_pallas.4} parent=15 // pred_check_branch
        %176 = sbr.rel (%p174) target = $region28
      $region27: #{block_forward_pallas.4} parent=15 // pred_region
        %p177 = scmp.lt.s32.totalorder %s16, 1
        %s178 = scalar_select %p177, %s16, 1
        %p179 = scmp.lt.s32.totalorder %s17, 3
        %s180 = scalar_select %p179, %s17, 3
        %s181 = smul.addr %s178, 4
        %s182 = sadd.s32 %s180, %s181
        %s183 = smul.addr %s182, 8
        %s184 = scalar_lea.vmem %s2, %s183
      $region28: #{block_forward_pallas.4} parent=15 // pred_fallthru
        _
    $region16: #{block_forward_pallas.4} parent=5 // pred_fallthru
      _
    %p185 = scmp.le.s32.totalorder 1, %s9
    %p186 = scmp.lt.s32.totalorder %s9, 9
    %p187 = pnand %p185, %p186
    %p188 = pneg %p187
    // Predicated region
    $region29: #{block_forward_pallas.4} parent=5 // pred_check
      _
    $region30: #{block_forward_pallas.4} parent=5 // pred_check_branch
      %190 = sbr.rel (%p187) target = $region32
    $region31: #{block_forward_pallas.4} parent=5 // pred_region
      %s191 = ssub.s32 %s9, 1
      %p192 = scmp.lt.s32.totalorder %s18, 1
      %s193 = scalar_select %p192, %s18, 1
      %p194 = scmp.lt.s32.totalorder %s19, 3
      %s195 = scalar_select %p194, %s19, 3
      %s196 = smul.addr %s193, 4
      %s197 = sadd.s32 %s195, %s196
      %s198 = smul.addr %s197, 8
      %s199 = scalar_lea.vmem %s0, %s198
      %p200 = pneg %p49
      %p201 = pneg %p46
      %p202 = scmp.lt.s32.totalorder %s18, 1
      %s203 = scalar_select %p202, %s18, 1
      %p204 = scmp.lt.s32.totalorder %s19, 3
      %s205 = scalar_select %p204, %s19, 3
      %s206 = smul.addr %s203, 4
      %s207 = sadd.s32 %s205, %s206
      %s208 = smul.addr %s207, 8
      %s209 = scalar_lea.vmem %s1, %s208
      %p210 = pneg %p77
      %p211 = pneg %p74
      %p212 = scmp.lt.s32.totalorder %s18, 1
      %s213 = scalar_select %p212, %s18, 1
      %p214 = scmp.lt.s32.totalorder %s19, 3
      %s215 = scalar_select %p214, %s19, 3
      %s216 = smul.addr %s213, 4
      %s217 = sadd.s32 %s215, %s216
      %s218 = smul.addr %s217, 8
      %s219 = scalar_lea.vmem %s2, %s218
      %p220 = pneg %p105
      %p221 = pneg %p102
      %p222 = pneg %p133
      %p223 = pneg %p130
      %p224 = scmp.lt.s32.totalorder %s18, 1
      %s225 = scalar_select %p224, %s18, 1
      %p226 = scmp.lt.s32.totalorder %s19, 3
      %s227 = scalar_select %p226, %s19, 3
      %s228 = smul.addr %s225, 4
      %s229 = sadd.s32 %s227, %s228
      %s230 = smul.addr %s229, 8
      %s231 = scalar_lea.vmem %s3, %s230
      %p232 = scmp.lt.s32.totalorder %s18, 1
      %s233 = scalar_select %p232, %s18, 1
      %p234 = scmp.lt.s32.totalorder %s19, 3
      %s235 = scalar_select %p234, %s19, 3
      %s236 = smul.addr %s233, 4
      %s237 = sadd.s32 %s235, %s236
      %s238 = smul.addr %s237, 8
      %s239 = scalar_lea.vmem %s0, %s238
      %p240 = scmp.lt.s32.totalorder %s18, 1
      %s241 = scalar_select %p240, %s18, 1
      %p242 = scmp.lt.s32.totalorder %s19, 3
      %s243 = scalar_select %p242, %s19, 3
      %s244 = smul.addr %s241, 4
      %s245 = sadd.s32 %s243, %s244
      %s246 = smul.addr %s245, 8
      %s247 = scalar_lea.vmem %s1, %s246
      %p248 = scmp.lt.s32.totalorder %s18, 1
      %s249 = scalar_select %p248, %s18, 1
      %p250 = scmp.lt.s32.totalorder %s19, 3
      %s251 = scalar_select %p250, %s19, 3
      %s252 = smul.addr %s249, 4
      %s253 = sadd.s32 %s251, %s252
      %s254 = smul.addr %s253, 8
      %s255 = scalar_lea.vmem %s2, %s254
      %p256 = scmp.lt.s32.totalorder %s18, 1
      %s257 = scalar_select %p256, %s18, 1
      %p258 = scmp.lt.s32.totalorder %s19, 3
      %s259 = scalar_select %p258, %s19, 3
      %s260 = smul.addr %s257, 4
      %s261 = sadd.s32 %s259, %s260
      %s262 = smul.addr %s261, 8
      %s263 = scalar_lea.vmem %s3, %s262
      %v264 = vld [vmem:[%s239] sm:$0xff]
      %v265 = vld [vmem:[%s247] sm:$0xff]
      %v266 = vld [vmem:[%s255] sm:$0xff]
      %vm267 = vcmask 64512
      %v269 = vsel %vm267, %v264, 0
      %v272 = vsel %vm267, %v265, 0
      %274 = vmatprep.subr.mxu0 0.0
      %275 = vmatpush1.xpose.msra.mxu0 %v272
      %276 = vmatprep.subr.mxu0 0.0
      %277 = vmatpush1.xpose.msra.mxu0 0.0
      %278 = vmatprep.subr.mxu0 0.0
      %279 = vmatpush1.xpose.msra.mxu0 0.0
      %280 = vmatprep.subr.mxu0 0.0
      %281 = vmatpush1.xpose.msra.mxu0 0.0
      %282 = vmatprep.subr.mxu0 0.0
      %283 = vmatpush1.xpose.msra.mxu0 0.0
      %284 = vmatprep.subr.mxu0 0.0
      %285 = vmatpush1.xpose.msra.mxu0 0.0
      %286 = vmatprep.subr.mxu0 0.0
      %287 = vmatpush1.xpose.msra.mxu0 0.0
      %288 = vmatprep.subr.mxu0 0.0
      %289 = vmatpush1.xpose.msra.mxu0 0.0
      %290 = vmatprep.subr.mxu0 0.0
      %291 = vmatpush1.xpose.msra.mxu0 0.0
      %292 = vmatprep.subr.mxu0 0.0
      %293 = vmatpush1.xpose.msra.mxu0 0.0
      %294 = vmatprep.subr.mxu0 0.0
      %295 = vmatpush1.xpose.msra.mxu0 0.0
      %296 = vmatprep.subr.mxu0 0.0
      %297 = vmatpush1.xpose.msra.mxu0 0.0
      %298 = vmatprep.subr.mxu0 0.0
      %299 = vmatpush1.xpose.msra.mxu0 0.0
      %300 = vmatprep.subr.mxu0 0.0
      %301 = vmatpush1.xpose.msra.mxu0 0.0
      %302 = vmatprep.subr.mxu0 0.0
      %303 = vmatpush1.xpose.msra.mxu0 0.0
      %304 = vmatprep.subr.mxu0 0.0
      %305 = vmatpush1.xpose.msra.mxu0 0.0
      %306 = vmatprep.subr.mxu0 0.0
      %307 = vmatpush1.xpose.msra.mxu0 0.0
      %308 = vmatprep.subr.mxu0 0.0
      %309 = vmatpush1.xpose.msra.mxu0 0.0
      %310 = vmatprep.subr.mxu0 0.0
      %311 = vmatpush1.xpose.msra.mxu0 0.0
      %312 = vmatprep.subr.mxu0 0.0
      %313 = vmatpush1.xpose.msra.mxu0 0.0
      %314 = vmatprep.subr.mxu0 0.0
      %315 = vmatpush1.xpose.msra.mxu0 0.0
      %316 = vmatprep.subr.mxu0 0.0
      %317 = vmatpush1.xpose.msra.mxu0 0.0
      %318 = vmatprep.subr.mxu0 0.0
      %319 = vmatpush1.xpose.msra.mxu0 0.0
      %320 = vmatprep.subr.mxu0 0.0
      %321 = vmatpush1.xpose.msra.mxu0 0.0
      %322 = vmatprep.subr.mxu0 0.0
      %323 = vmatpush1.xpose.msra.mxu0 0.0
      %324 = vmatprep.subr.mxu0 0.0
      %325 = vmatpush1.xpose.msra.mxu0 0.0
      %326 = vmatprep.subr.mxu0 0.0
      %327 = vmatpush1.xpose.msra.mxu0 0.0
      %328 = vmatprep.subr.mxu0 0.0
      %329 = vmatpush1.xpose.msra.mxu0 0.0
      %330 = vmatprep.subr.mxu0 0.0
      %331 = vmatpush1.xpose.msra.mxu0 0.0
      %332 = vmatprep.subr.mxu0 0.0
      %333 = vmatpush1.xpose.msra.mxu0 0.0
      %334 = vmatprep.subr.mxu0 0.0
      %335 = vmatpush1.xpose.msra.mxu0 0.0
      %336 = vmatprep.subr.mxu0 0.0
      %337 = vmatpush1.xpose.msra.mxu0 0.0
      %338 = vmatprep.mubr.f32.mxu0 0.0
      %339 = vmatmul.mubr.f32.gmra.mrb[0].mxu0 %v269
      %v340 = vpop.f32.mrb[0].mxu0
      %v341 = vadd.f32 0.0, %v340
      %v342 = vpop.f32.mrb[0].mxu0
      %343 = vdwg.mxu0
      %v344 = vmul.f32 %v341, 0.35355338
      %v345 = vlaneseq
      %v346 = vshrl.u32 %v345, 7
      %v347 = vlaneseq
      %v348 = vand.u32 %v347, 127
      %vm349 = vcmp.le.s32.totalorder %v348, %v346
      %v350 = vsel %vm349, %v344, -1e+30
      %v351 = vsel %vm267, %v350, -inf
      %352 = vmax.xlane.f32.xlu0 %v351
      %v353 = vpop.xlane.xlu0 %352
      %v354 = vsub.f32 %v350, %v353
      %v355 = vmul.f32 %v354, 1.442695
      %v356 = vpow.pop %v355
      %v357 = vsel %vm267, %v356, 0.0
      %358 = vadd.xlane.f32.xlu0 %v357
      %v359 = vpop.xlane.xlu0 %358
      %v360 = vrcp.pop %v359
      %v361 = vmul.f32 %v356, %v360
      %v363 = vsel %vm267, %v361, 0
      %365 = vmatprep.subr.mxu0 0.0
      %366 = vmatpush1.msra.mxu0 %v266
      %367 = vmatprep.subr.mxu0 0.0
      %368 = vmatpush1.msra.mxu0 0.0
      %369 = vmatprep.subr.mxu0 0.0
      %370 = vmatpush1.msra.mxu0 0.0
      %371 = vmatprep.subr.mxu0 0.0
      %372 = vmatpush1.msra.mxu0 0.0
      %373 = vmatprep.subr.mxu0 0.0
      %374 = vmatpush1.msra.mxu0 0.0
      %375 = vmatprep.subr.mxu0 0.0
      %376 = vmatpush1.msra.mxu0 0.0
      %377 = vmatprep.subr.mxu0 0.0
      %378 = vmatpush1.msra.mxu0 0.0
      %379 = vmatprep.subr.mxu0 0.0
      %380 = vmatpush1.msra.mxu0 0.0
      %381 = vmatprep.subr.mxu0 0.0
      %382 = vmatpush1.msra.mxu0 0.0
      %383 = vmatprep.subr.mxu0 0.0
      %384 = vmatpush1.msra.mxu0 0.0
      %385 = vmatprep.subr.mxu0 0.0
      %386 = vmatpush1.msra.mxu0 0.0
      %387 = vmatprep.subr.mxu0 0.0
      %388 = vmatpush1.msra.mxu0 0.0
      %389 = vmatprep.subr.mxu0 0.0
      %390 = vmatpush1.msra.mxu0 0.0
      %391 = vmatprep.subr.mxu0 0.0
      %392 = vmatpush1.msra.mxu0 0.0
      %393 = vmatprep.subr.mxu0 0.0
      %394 = vmatpush1.msra.mxu0 0.0
      %395 = vmatprep.subr.mxu0 0.0
      %396 = vmatpush1.msra.mxu0 0.0
      %397 = vmatprep.subr.mxu0 0.0
      %398 = vmatpush1.msra.mxu0 0.0
      %399 = vmatprep.subr.mxu0 0.0
      %400 = vmatpush1.msra.mxu0 0.0
      %401 = vmatprep.subr.mxu0 0.0
      %402 = vmatpush1.msra.mxu0 0.0
      %403 = vmatprep.subr.mxu0 0.0
      %404 = vmatpush1.msra.mxu0 0.0
      %405 = vmatprep.subr.mxu0 0.0
      %406 = vmatpush1.msra.mxu0 0.0
      %407 = vmatprep.subr.mxu0 0.0
      %408 = vmatpush1.msra.mxu0 0.0
      %409 = vmatprep.subr.mxu0 0.0
      %410 = vmatpush1.msra.mxu0 0.0
      %411 = vmatprep.subr.mxu0 0.0
      %412 = vmatpush1.msra.mxu0 0.0
      %413 = vmatprep.subr.mxu0 0.0
      %414 = vmatpush1.msra.mxu0 0.0
      %415 = vmatprep.subr.mxu0 0.0
      %416 = vmatpush1.msra.mxu0 0.0
      %417 = vmatprep.subr.mxu0 0.0
      %418 = vmatpush1.msra.mxu0 0.0
      %419 = vmatprep.subr.mxu0 0.0
      %420 = vmatpush1.msra.mxu0 0.0
      %421 = vmatprep.subr.mxu0 0.0
      %422 = vmatpush1.msra.mxu0 0.0
      %423 = vmatprep.subr.mxu0 0.0
      %424 = vmatpush1.msra.mxu0 0.0
      %425 = vmatprep.subr.mxu0 0.0
      %426 = vmatpush1.msra.mxu0 0.0
      %427 = vmatprep.subr.mxu0 0.0
      %428 = vmatpush1.msra.mxu0 0.0
      %429 = vmatprep.mubr.f32.mxu0 0.0
      %430 = vmatmul.mubr.f32.gmra.mrb[0].mxu0 %v363
      %v431 = vpop.f32.mrb[0].mxu0
      %v432 = vadd.f32 0.0, %v431
      %v433 = vpop.f32.mrb[0].mxu0
      %434 = vdwg.mxu0
      %435 = vst.msk [vmem:[%s263] sm:$0xff] %vm267, %v432
      %p436 = scmp.lt.s32.totalorder %s18, 1
      %s437 = scalar_select %p436, %s18, 1
      %p438 = scmp.lt.s32.totalorder %s19, 3
      %s439 = scalar_select %p438, %s19, 3
      %s440 = smul.addr %s437, 4
      %s441 = sadd.s32 %s439, %s440
      %s442 = smul.addr %s441, 8
      %s443 = scalar_lea.vmem %s3, %s442
      // Predicated region
      $region33: #{block_forward_pallas.4} parent=31 // pred_check
        %p444 = pneg %p130
      $region34: #{block_forward_pallas.4} parent=31 // pred_check_branch
        %446 = sbr.rel (%p444) target = $region36
      $region35: #{block_forward_pallas.4} parent=31 // pred_region
        _
      $region36: #{block_forward_pallas.4} parent=31 // pred_fallthru
        _
    $region32: #{block_forward_pallas.4} parent=5 // pred_fallthru
      _
    %p447 = scmp.le.s32.totalorder 2, %s9
    // Predicated region
    $region37: #{block_forward_pallas.4} parent=5 // pred_check
      %p448 = pneg %p447
    $region38: #{block_forward_pallas.4} parent=5 // pred_check_branch
      %450 = sbr.rel (%p448) target = $region40
    $region39: #{block_forward_pallas.4} parent=5 // pred_region
      %s451 = ssub.s32 %s9, 2
      // Predicated region
      $region41: #{block_forward_pallas.4} parent=39 // pred_check
        %p452 = pneg %p136
      $region42: #{block_forward_pallas.4} parent=39 // pred_check_branch
        %454 = sbr.rel (%p452) target = $region44
      $region43: #{block_forward_pallas.4} parent=39 // pred_region
        %p455 = scmp.lt.s32.totalorder %s20, 1
        %s456 = scalar_select %p455, %s20, 1
        %p457 = scmp.lt.s32.totalorder %s21, 3
        %s458 = scalar_select %p457, %s21, 3
        %s459 = smul.addr %s456, 4
        %s460 = sadd.s32 %s458, %s459
        %s461 = smul.addr %s460, 8
        %s462 = scalar_lea.vmem %s3, %s461
      $region44: #{block_forward_pallas.4} parent=39 // pred_fallthru
        _
    $region40: #{block_forward_pallas.4} parent=5 // pred_fallthru
      _
  $region6: #{block_forward_pallas.4} parent=0 // loop_footer
    %s13 = sadd.s32 1, %s9
  $region7: #{block_forward_pallas.4} parent=0 // loop_footer_branch
    %8 = sbr.rel target = $region3
  $region8: #{block_forward_pallas.4} parent=0 // loop_exit
    _

</llo_original>
